<compile_context>
chip_gen: v6e
topology: v6e:2x2x1
jax: 0.10.0
libtpu: 0.0.40
codegen_flags: <defaults>
</compile_context>

<pallas_src>
import jax
import jax.numpy as jnp
from jax.experimental import pallas as pl
from jax.experimental.pallas import tpu as pltpu

# ---- model dims ------------------------------------------------------------
B_SZ   = 2                    # batch
T_LEN  = 8                    # sequence length
IN_DIM = 1
N1     = 2                    # StateSpace(2, in_dim=1) state/output dim
ORDER  = 3                    # StateNeuron order (state dim)
OUTDIM = 1
S_DIM  = N1 + ORDER           # fused state dim  = 5
W_DIM  = IN_DIM + OUTDIM      # exogenous dim    = 2  ([u, y_obs])
P_LEN  = S_DIM * S_DIM + S_DIM * W_DIM + S_DIM + 1   # 41 fused scalars


def dsso_kernel(p_ref, x_ref, yo_ref, out_ref):
    """Fused forward of the whole StateModel.

    p_ref:   (P_LEN,)  SMEM  fused scalar weights [M | N | G | hu]
    x_ref:   (B, T)    VMEM  input sequence
    yo_ref:  (B, T)    VMEM  observer measurements
    out_ref: (B, T)    VMEM  prediction (tanh applied)
    """
    B, T = x_ref.shape

    # ---- hoisted scalar-weight reads from SMEM (41 scalar loads, once) -----
    m = [[p_ref[i * S_DIM + j] for j in range(S_DIM)] for i in range(S_DIM)]
    off = S_DIM * S_DIM
    n = [[p_ref[off + i * W_DIM + k] for k in range(W_DIM)] for i in range(S_DIM)]
    off += S_DIM * W_DIM
    g = [p_ref[off + j] for j in range(S_DIM)]
    hu = p_ref[off + S_DIM]

    # ---- hoisted input loads: whole sequences live in registers ------------
    xv = x_ref[...]                                   # (B, T)
    yv = yo_ref[...]                                  # (B, T)

    # fused state s = [h1 (2) ; h2 (3)], batch-vectorized columns
    s = [jnp.zeros((B, 1), jnp.float32) for _ in range(S_DIM)]
    ys = []

    # fully unrolled recurrence (T is a small static constant)
    for t in range(T):
        u  = xv[:, t:t + 1]                           # (B, 1) static slice
        yo = yv[:, t:t + 1]                           # (B, 1)

        # pre-activation output  ylin_t = G s_t + hu * u_t   (VALU fmadds)
        ylin = hu * u
        for j in range(S_DIM):
            ylin = ylin + g[j] * s[j]
        ys.append(ylin)

        # state update  s_{t+1} = M s_t + N [u_t ; yobs_t]
        s_next = []
        for i in range(S_DIM):
            acc = n[i][0] * u + n[i][1] * yo
            for j in range(S_DIM):
                acc = acc + m[i][j] * s[j]
            s_next.append(acc)
        s = s_next

    # single writeback: one tanh (EUP) over the whole tile, one store
    out_ref[...] = jnp.tanh(jnp.concatenate(ys, axis=1))


def _fuse_params(p):
    """Fold StateSpace + StateNeuron(observer) into one affine recurrence.

        h1' = A1 h1 + B1 u
        y1  = C1 h1 + D1 u
        ylin= C2 h2 + D2 y1
        h2' = A2 h2 + B2 y1 + L2 (yobs - ylin)

    With s = [h1; h2], w = [u; yobs]:
        s'   = M s + N w,   ylin = G s + hu * u
    """
    A1, B1, C1, D1 = p["A1"], p["B1"], p["C1"], p["D1"]
    A2, B2, C2, D2, L2 = p["A2"], p["B2"], p["C2"], p["D2"], p["L2"]
    D2C1 = D2 @ C1                                   # (1, 2)
    D2D1 = D2 @ D1                                   # (1, 1)

    M = jnp.concatenate([
        jnp.concatenate([A1, jnp.zeros((N1, ORDER), jnp.float32)], axis=1),
        jnp.concatenate([B2 @ C1 - L2 @ D2C1, A2 - L2 @ C2], axis=1)],
        axis=0)                                      # (5, 5)
    N = jnp.concatenate([
        jnp.concatenate([B1, jnp.zeros((N1, OUTDIM), jnp.float32)], axis=1),
        jnp.concatenate([B2 @ D1 - L2 @ D2D1, L2], axis=1)],
        axis=0)                                      # (5, 2)
    G = jnp.concatenate([D2C1, C2], axis=1)          # (1, 5)
    hu = D2D1.reshape((1,))                          # (1,)

    return jnp.concatenate(
        [M.reshape(-1), N.reshape(-1), G.reshape(-1), hu]).astype(jnp.float32)


def dsso_forward(x_btd, yobs_btd, params):
    """(B, T, IN_DIM), (B, T, OUTDIM) -> (B, T, OUTDIM).  No transposes."""
    B, T, _ = x_btd.shape
    p_flat = _fuse_params(params)                    # (41,) param-only precompute
    x2 = x_btd[:, :, 0].astype(jnp.float32)          # (B, T)  free squeeze
    yo2 = yobs_btd[:, :, 0].astype(jnp.float32)      # (B, T)

    out2d = pl.pallas_call(
        dsso_kernel,
        out_shape=jax.ShapeDtypeStruct((B, T), jnp.float32),
        in_specs=[pl.BlockSpec(memory_space=pltpu.MemorySpace.SMEM),   # weights
                  pl.BlockSpec(memory_space=pltpu.MemorySpace.VMEM),   # x
                  pl.BlockSpec(memory_space=pltpu.MemorySpace.VMEM)],  # y_obs
        out_specs=pl.BlockSpec(memory_space=pltpu.MemorySpace.VMEM),
    )(p_flat, x2, yo2)

    return out2d[:, :, None]                         # (B, T, OUTDIM)


def reference_forward(x_btd, yobs_btd, p):
    """Pure-JAX reference on the ORIGINAL (unfused) parameters."""
    B, T, _ = x_btd.shape
    h1 = jnp.zeros((B, N1), jnp.float32)
    h2 = jnp.zeros((B, ORDER), jnp.float32)
    outs = []
    for t in range(T):
        u = x_btd[:, t]
        y1 = h1 @ p["C1"].T + u @ p["D1"].T
        h1 = h1 @ p["A1"].T + u @ p["B1"].T
        y2_lin = h2 @ p["C2"].T + y1 @ p["D2"].T
        y2 = jnp.tanh(y2_lin)
        h2 = h2 @ p["A2"].T + y1 @ p["B2"].T + (yobs_btd[:, t] - y2_lin) @ p["L2"].T
        outs.append(y2)
    return jnp.stack(outs, axis=1)


def init_params(key):
    """Deterministic init matching reset_parameter(): U(-0.5, 0.5)."""
    shapes = {
        # StateSpace(2, in_dim=1)
        "A1": (N1, N1), "B1": (N1, IN_DIM), "C1": (N1, N1), "D1": (N1, IN_DIM),
        # StateNeuron(order=3, in_dim=2, out_dim=1, observer=True)
        "A2": (ORDER, ORDER), "B2": (ORDER, N1),
        "C2": (OUTDIM, ORDER), "D2": (OUTDIM, N1), "L2": (ORDER, OUTDIM),
    }
    params = {}
    for name, shp in shapes.items():
        key, sub = jax.random.split(key)
        params[name] = jax.random.uniform(sub, shp, jnp.float32, -0.5, 0.5)
    return params


if __name__ == "__main__":
    key = jax.random.PRNGKey(0)
    kp, kx, ky = jax.random.split(key, 3)
    params = init_params(kp)

    x = jax.random.normal(kx, (B_SZ, T_LEN, IN_DIM), jnp.float32)
    y_obs = jax.random.normal(ky, (B_SZ, T_LEN, OUTDIM), jnp.float32)

    fwd = jax.jit(dsso_forward)
    out = jax.block_until_ready(fwd(x, y_obs, params))
    ref = jax.block_until_ready(reference_forward(x, y_obs, params))

    assert out.shape == (B_SZ, T_LEN, OUTDIM)
    assert jnp.allclose(out, ref, atol=1e-4, rtol=1e-4), (out, ref)
    print("KERNEL_OK")
</pallas_src>

<mosaic_0001>
module attributes {stable_mosaic.version = 11 : i64} {
  func.func @dsso_kernel(%arg0: memref<41xf32, #tpu.memory_space<smem>>, %arg1: memref<2x8xf32, #tpu.memory_space<vmem>>, %arg2: memref<2x8xf32, #tpu.memory_space<vmem>>, %arg3: memref<2x8xf32, #tpu.memory_space<vmem>>) attributes {dimension_semantics = [], scalar_prefetch = 0 : i64, scratch_operands = 0 : i64, tpu.core_type = #tpu.core_type<tc>} {
    %c0 = arith.constant 0 : index
    %0 = memref.load %arg0[%c0] : memref<41xf32, #tpu.memory_space<smem>>
    %c1 = arith.constant 1 : index
    %1 = memref.load %arg0[%c1] : memref<41xf32, #tpu.memory_space<smem>>
    %c2 = arith.constant 2 : index
    %2 = memref.load %arg0[%c2] : memref<41xf32, #tpu.memory_space<smem>>
    %c3 = arith.constant 3 : index
    %3 = memref.load %arg0[%c3] : memref<41xf32, #tpu.memory_space<smem>>
    %c4 = arith.constant 4 : index
    %4 = memref.load %arg0[%c4] : memref<41xf32, #tpu.memory_space<smem>>
    %c5 = arith.constant 5 : index
    %5 = memref.load %arg0[%c5] : memref<41xf32, #tpu.memory_space<smem>>
    %c6 = arith.constant 6 : index
    %6 = memref.load %arg0[%c6] : memref<41xf32, #tpu.memory_space<smem>>
    %c7 = arith.constant 7 : index
    %7 = memref.load %arg0[%c7] : memref<41xf32, #tpu.memory_space<smem>>
    %c8 = arith.constant 8 : index
    %8 = memref.load %arg0[%c8] : memref<41xf32, #tpu.memory_space<smem>>
    %c9 = arith.constant 9 : index
    %9 = memref.load %arg0[%c9] : memref<41xf32, #tpu.memory_space<smem>>
    %c10 = arith.constant 10 : index
    %10 = memref.load %arg0[%c10] : memref<41xf32, #tpu.memory_space<smem>>
    %c11 = arith.constant 11 : index
    %11 = memref.load %arg0[%c11] : memref<41xf32, #tpu.memory_space<smem>>
    %c12 = arith.constant 12 : index
    %12 = memref.load %arg0[%c12] : memref<41xf32, #tpu.memory_space<smem>>
    %c13 = arith.constant 13 : index
    %13 = memref.load %arg0[%c13] : memref<41xf32, #tpu.memory_space<smem>>
    %c14 = arith.constant 14 : index
    %14 = memref.load %arg0[%c14] : memref<41xf32, #tpu.memory_space<smem>>
    %c15 = arith.constant 15 : index
    %15 = memref.load %arg0[%c15] : memref<41xf32, #tpu.memory_space<smem>>
    %c16 = arith.constant 16 : index
    %16 = memref.load %arg0[%c16] : memref<41xf32, #tpu.memory_space<smem>>
    %c17 = arith.constant 17 : index
    %17 = memref.load %arg0[%c17] : memref<41xf32, #tpu.memory_space<smem>>
    %c18 = arith.constant 18 : index
    %18 = memref.load %arg0[%c18] : memref<41xf32, #tpu.memory_space<smem>>
    %c19 = arith.constant 19 : index
    %19 = memref.load %arg0[%c19] : memref<41xf32, #tpu.memory_space<smem>>
    %c20 = arith.constant 20 : index
    %20 = memref.load %arg0[%c20] : memref<41xf32, #tpu.memory_space<smem>>
    %c21 = arith.constant 21 : index
    %21 = memref.load %arg0[%c21] : memref<41xf32, #tpu.memory_space<smem>>
    %c22 = arith.constant 22 : index
    %22 = memref.load %arg0[%c22] : memref<41xf32, #tpu.memory_space<smem>>
    %c23 = arith.constant 23 : index
    %23 = memref.load %arg0[%c23] : memref<41xf32, #tpu.memory_space<smem>>
    %c24 = arith.constant 24 : index
    %24 = memref.load %arg0[%c24] : memref<41xf32, #tpu.memory_space<smem>>
    %c25 = arith.constant 25 : index
    %25 = memref.load %arg0[%c25] : memref<41xf32, #tpu.memory_space<smem>>
    %c26 = arith.constant 26 : index
    %26 = memref.load %arg0[%c26] : memref<41xf32, #tpu.memory_space<smem>>
    %c27 = arith.constant 27 : index
    %27 = memref.load %arg0[%c27] : memref<41xf32, #tpu.memory_space<smem>>
    %c28 = arith.constant 28 : index
    %28 = memref.load %arg0[%c28] : memref<41xf32, #tpu.memory_space<smem>>
    %c29 = arith.constant 29 : index
    %29 = memref.load %arg0[%c29] : memref<41xf32, #tpu.memory_space<smem>>
    %c30 = arith.constant 30 : index
    %30 = memref.load %arg0[%c30] : memref<41xf32, #tpu.memory_space<smem>>
    %c31 = arith.constant 31 : index
    %31 = memref.load %arg0[%c31] : memref<41xf32, #tpu.memory_space<smem>>
    %c32 = arith.constant 32 : index
    %32 = memref.load %arg0[%c32] : memref<41xf32, #tpu.memory_space<smem>>
    %c33 = arith.constant 33 : index
    %33 = memref.load %arg0[%c33] : memref<41xf32, #tpu.memory_space<smem>>
    %c34 = arith.constant 34 : index
    %34 = memref.load %arg0[%c34] : memref<41xf32, #tpu.memory_space<smem>>
    %c35 = arith.constant 35 : index
    %35 = memref.load %arg0[%c35] : memref<41xf32, #tpu.memory_space<smem>>
    %c36 = arith.constant 36 : index
    %36 = memref.load %arg0[%c36] : memref<41xf32, #tpu.memory_space<smem>>
    %c37 = arith.constant 37 : index
    %37 = memref.load %arg0[%c37] : memref<41xf32, #tpu.memory_space<smem>>
    %c38 = arith.constant 38 : index
    %38 = memref.load %arg0[%c38] : memref<41xf32, #tpu.memory_space<smem>>
    %c39 = arith.constant 39 : index
    %39 = memref.load %arg0[%c39] : memref<41xf32, #tpu.memory_space<smem>>
    %c40 = arith.constant 40 : index
    %40 = memref.load %arg0[%c40] : memref<41xf32, #tpu.memory_space<smem>>
    %c0_0 = arith.constant 0 : index
    %c0_1 = arith.constant 0 : index
    %41 = vector.load %arg1[%c0_0, %c0_1] : memref<2x8xf32, #tpu.memory_space<vmem>>, vector<2x8xf32>
    %c0_2 = arith.constant 0 : index
    %c0_3 = arith.constant 0 : index
    %42 = vector.load %arg2[%c0_2, %c0_3] : memref<2x8xf32, #tpu.memory_space<vmem>>, vector<2x8xf32>
    %cst = arith.constant 0.000000e+00 : f32
    %43 = vector.broadcast %cst : f32 to vector<2x1xf32>
    %cst_4 = arith.constant 0.000000e+00 : f32
    %44 = vector.broadcast %cst_4 : f32 to vector<2x1xf32>
    %cst_5 = arith.constant 0.000000e+00 : f32
    %45 = vector.broadcast %cst_5 : f32 to vector<2x1xf32>
    %cst_6 = arith.constant 0.000000e+00 : f32
    %46 = vector.broadcast %cst_6 : f32 to vector<2x1xf32>
    %cst_7 = arith.constant 0.000000e+00 : f32
    %47 = vector.broadcast %cst_7 : f32 to vector<2x1xf32>
    %48 = vector.extract_strided_slice %41 {offsets = [0, 0], sizes = [2, 1], strides = [1, 1]} : vector<2x8xf32> to vector<2x1xf32>
    %49 = vector.extract_strided_slice %42 {offsets = [0, 0], sizes = [2, 1], strides = [1, 1]} : vector<2x8xf32> to vector<2x1xf32>
    %50 = vector.broadcast %40 : f32 to vector<2x1xf32>
    %51 = arith.mulf %50, %48 : vector<2x1xf32>
    %52 = vector.broadcast %35 : f32 to vector<2x1xf32>
    %53 = arith.mulf %52, %43 : vector<2x1xf32>
    %54 = arith.addf %51, %53 : vector<2x1xf32>
    %55 = vector.broadcast %36 : f32 to vector<2x1xf32>
    %56 = arith.mulf %55, %44 : vector<2x1xf32>
    %57 = arith.addf %54, %56 : vector<2x1xf32>
    %58 = vector.broadcast %37 : f32 to vector<2x1xf32>
    %59 = arith.mulf %58, %45 : vector<2x1xf32>
    %60 = arith.addf %57, %59 : vector<2x1xf32>
    %61 = vector.broadcast %38 : f32 to vector<2x1xf32>
    %62 = arith.mulf %61, %46 : vector<2x1xf32>
    %63 = arith.addf %60, %62 : vector<2x1xf32>
    %64 = vector.broadcast %39 : f32 to vector<2x1xf32>
    %65 = arith.mulf %64, %47 : vector<2x1xf32>
    %66 = arith.addf %63, %65 : vector<2x1xf32>
    %67 = vector.broadcast %25 : f32 to vector<2x1xf32>
    %68 = arith.mulf %67, %48 : vector<2x1xf32>
    %69 = vector.broadcast %26 : f32 to vector<2x1xf32>
    %70 = arith.mulf %69, %49 : vector<2x1xf32>
    %71 = arith.addf %68, %70 : vector<2x1xf32>
    %72 = vector.broadcast %0 : f32 to vector<2x1xf32>
    %73 = arith.mulf %72, %43 : vector<2x1xf32>
    %74 = arith.addf %71, %73 : vector<2x1xf32>
    %75 = vector.broadcast %1 : f32 to vector<2x1xf32>
    %76 = arith.mulf %75, %44 : vector<2x1xf32>
    %77 = arith.addf %74, %76 : vector<2x1xf32>
    %78 = vector.broadcast %2 : f32 to vector<2x1xf32>
    %79 = arith.mulf %78, %45 : vector<2x1xf32>
    %80 = arith.addf %77, %79 : vector<2x1xf32>
    %81 = vector.broadcast %3 : f32 to vector<2x1xf32>
    %82 = arith.mulf %81, %46 : vector<2x1xf32>
    %83 = arith.addf %80, %82 : vector<2x1xf32>
    %84 = vector.broadcast %4 : f32 to vector<2x1xf32>
    %85 = arith.mulf %84, %47 : vector<2x1xf32>
    %86 = arith.addf %83, %85 : vector<2x1xf32>
    %87 = vector.broadcast %27 : f32 to vector<2x1xf32>
    %88 = arith.mulf %87, %48 : vector<2x1xf32>
    %89 = vector.broadcast %28 : f32 to vector<2x1xf32>
    %90 = arith.mulf %89, %49 : vector<2x1xf32>
    %91 = arith.addf %88, %90 : vector<2x1xf32>
    %92 = vector.broadcast %5 : f32 to vector<2x1xf32>
    %93 = arith.mulf %92, %43 : vector<2x1xf32>
    %94 = arith.addf %91, %93 : vector<2x1xf32>
    %95 = vector.broadcast %6 : f32 to vector<2x1xf32>
    %96 = arith.mulf %95, %44 : vector<2x1xf32>
    %97 = arith.addf %94, %96 : vector<2x1xf32>
    %98 = vector.broadcast %7 : f32 to vector<2x1xf32>
    %99 = arith.mulf %98, %45 : vector<2x1xf32>
    %100 = arith.addf %97, %99 : vector<2x1xf32>
    %101 = vector.broadcast %8 : f32 to vector<2x1xf32>
    %102 = arith.mulf %101, %46 : vector<2x1xf32>
    %103 = arith.addf %100, %102 : vector<2x1xf32>
    %104 = vector.broadcast %9 : f32 to vector<2x1xf32>
    %105 = arith.mulf %104, %47 : vector<2x1xf32>
    %106 = arith.addf %103, %105 : vector<2x1xf32>
    %107 = vector.broadcast %29 : f32 to vector<2x1xf32>
    %108 = arith.mulf %107, %48 : vector<2x1xf32>
    %109 = vector.broadcast %30 : f32 to vector<2x1xf32>
    %110 = arith.mulf %109, %49 : vector<2x1xf32>
    %111 = arith.addf %108, %110 : vector<2x1xf32>
    %112 = vector.broadcast %10 : f32 to vector<2x1xf32>
    %113 = arith.mulf %112, %43 : vector<2x1xf32>
    %114 = arith.addf %111, %113 : vector<2x1xf32>
    %115 = vector.broadcast %11 : f32 to vector<2x1xf32>
    %116 = arith.mulf %115, %44 : vector<2x1xf32>
    %117 = arith.addf %114, %116 : vector<2x1xf32>
    %118 = vector.broadcast %12 : f32 to vector<2x1xf32>
    %119 = arith.mulf %118, %45 : vector<2x1xf32>
    %120 = arith.addf %117, %119 : vector<2x1xf32>
    %121 = vector.broadcast %13 : f32 to vector<2x1xf32>
    %122 = arith.mulf %121, %46 : vector<2x1xf32>
    %123 = arith.addf %120, %122 : vector<2x1xf32>
    %124 = vector.broadcast %14 : f32 to vector<2x1xf32>
    %125 = arith.mulf %124, %47 : vector<2x1xf32>
    %126 = arith.addf %123, %125 : vector<2x1xf32>
    %127 = vector.broadcast %31 : f32 to vector<2x1xf32>
    %128 = arith.mulf %127, %48 : vector<2x1xf32>
    %129 = vector.broadcast %32 : f32 to vector<2x1xf32>
    %130 = arith.mulf %129, %49 : vector<2x1xf32>
    %131 = arith.addf %128, %130 : vector<2x1xf32>
    %132 = vector.broadcast %15 : f32 to vector<2x1xf32>
    %133 = arith.mulf %132, %43 : vector<2x1xf32>
    %134 = arith.addf %131, %133 : vector<2x1xf32>
    %135 = vector.broadcast %16 : f32 to vector<2x1xf32>
    %136 = arith.mulf %135, %44 : vector<2x1xf32>
    %137 = arith.addf %134, %136 : vector<2x1xf32>
    %138 = vector.broadcast %17 : f32 to vector<2x1xf32>
    %139 = arith.mulf %138, %45 : vector<2x1xf32>
    %140 = arith.addf %137, %139 : vector<2x1xf32>
    %141 = vector.broadcast %18 : f32 to vector<2x1xf32>
    %142 = arith.mulf %141, %46 : vector<2x1xf32>
    %143 = arith.addf %140, %142 : vector<2x1xf32>
    %144 = vector.broadcast %19 : f32 to vector<2x1xf32>
    %145 = arith.mulf %144, %47 : vector<2x1xf32>
    %146 = arith.addf %143, %145 : vector<2x1xf32>
    %147 = vector.broadcast %33 : f32 to vector<2x1xf32>
    %148 = arith.mulf %147, %48 : vector<2x1xf32>
    %149 = vector.broadcast %34 : f32 to vector<2x1xf32>
    %150 = arith.mulf %149, %49 : vector<2x1xf32>
    %151 = arith.addf %148, %150 : vector<2x1xf32>
    %152 = vector.broadcast %20 : f32 to vector<2x1xf32>
    %153 = arith.mulf %152, %43 : vector<2x1xf32>
    %154 = arith.addf %151, %153 : vector<2x1xf32>
    %155 = vector.broadcast %21 : f32 to vector<2x1xf32>
    %156 = arith.mulf %155, %44 : vector<2x1xf32>
    %157 = arith.addf %154, %156 : vector<2x1xf32>
    %158 = vector.broadcast %22 : f32 to vector<2x1xf32>
    %159 = arith.mulf %158, %45 : vector<2x1xf32>
    %160 = arith.addf %157, %159 : vector<2x1xf32>
    %161 = vector.broadcast %23 : f32 to vector<2x1xf32>
    %162 = arith.mulf %161, %46 : vector<2x1xf32>
    %163 = arith.addf %160, %162 : vector<2x1xf32>
    %164 = vector.broadcast %24 : f32 to vector<2x1xf32>
    %165 = arith.mulf %164, %47 : vector<2x1xf32>
    %166 = arith.addf %163, %165 : vector<2x1xf32>
    %167 = vector.extract_strided_slice %41 {offsets = [0, 1], sizes = [2, 1], strides = [1, 1]} : vector<2x8xf32> to vector<2x1xf32>
    %168 = vector.extract_strided_slice %42 {offsets = [0, 1], sizes = [2, 1], strides = [1, 1]} : vector<2x8xf32> to vector<2x1xf32>
    %169 = vector.broadcast %40 : f32 to vector<2x1xf32>
    %170 = arith.mulf %169, %167 : vector<2x1xf32>
    %171 = vector.broadcast %35 : f32 to vector<2x1xf32>
    %172 = arith.mulf %171, %86 : vector<2x1xf32>
    %173 = arith.addf %170, %172 : vector<2x1xf32>
    %174 = vector.broadcast %36 : f32 to vector<2x1xf32>
    %175 = arith.mulf %174, %106 : vector<2x1xf32>
    %176 = arith.addf %173, %175 : vector<2x1xf32>
    %177 = vector.broadcast %37 : f32 to vector<2x1xf32>
    %178 = arith.mulf %177, %126 : vector<2x1xf32>
    %179 = arith.addf %176, %178 : vector<2x1xf32>
    %180 = vector.broadcast %38 : f32 to vector<2x1xf32>
    %181 = arith.mulf %180, %146 : vector<2x1xf32>
    %182 = arith.addf %179, %181 : vector<2x1xf32>
    %183 = vector.broadcast %39 : f32 to vector<2x1xf32>
    %184 = arith.mulf %183, %166 : vector<2x1xf32>
    %185 = arith.addf %182, %184 : vector<2x1xf32>
    %186 = vector.broadcast %25 : f32 to vector<2x1xf32>
    %187 = arith.mulf %186, %167 : vector<2x1xf32>
    %188 = vector.broadcast %26 : f32 to vector<2x1xf32>
    %189 = arith.mulf %188, %168 : vector<2x1xf32>
    %190 = arith.addf %187, %189 : vector<2x1xf32>
    %191 = vector.broadcast %0 : f32 to vector<2x1xf32>
    %192 = arith.mulf %191, %86 : vector<2x1xf32>
    %193 = arith.addf %190, %192 : vector<2x1xf32>
    %194 = vector.broadcast %1 : f32 to vector<2x1xf32>
    %195 = arith.mulf %194, %106 : vector<2x1xf32>
    %196 = arith.addf %193, %195 : vector<2x1xf32>
    %197 = vector.broadcast %2 : f32 to vector<2x1xf32>
    %198 = arith.mulf %197, %126 : vector<2x1xf32>
    %199 = arith.addf %196, %198 : vector<2x1xf32>
    %200 = vector.broadcast %3 : f32 to vector<2x1xf32>
    %201 = arith.mulf %200, %146 : vector<2x1xf32>
    %202 = arith.addf %199, %201 : vector<2x1xf32>
    %203 = vector.broadcast %4 : f32 to vector<2x1xf32>
    %204 = arith.mulf %203, %166 : vector<2x1xf32>
    %205 = arith.addf %202, %204 : vector<2x1xf32>
    %206 = vector.broadcast %27 : f32 to vector<2x1xf32>
    %207 = arith.mulf %206, %167 : vector<2x1xf32>
    %208 = vector.broadcast %28 : f32 to vector<2x1xf32>
    %209 = arith.mulf %208, %168 : vector<2x1xf32>
    %210 = arith.addf %207, %209 : vector<2x1xf32>
    %211 = vector.broadcast %5 : f32 to vector<2x1xf32>
    %212 = arith.mulf %211, %86 : vector<2x1xf32>
    %213 = arith.addf %210, %212 : vector<2x1xf32>
    %214 = vector.broadcast %6 : f32 to vector<2x1xf32>
    %215 = arith.mulf %214, %106 : vector<2x1xf32>
    %216 = arith.addf %213, %215 : vector<2x1xf32>
    %217 = vector.broadcast %7 : f32 to vector<2x1xf32>
    %218 = arith.mulf %217, %126 : vector<2x1xf32>
    %219 = arith.addf %216, %218 : vector<2x1xf32>
    %220 = vector.broadcast %8 : f32 to vector<2x1xf32>
    %221 = arith.mulf %220, %146 : vector<2x1xf32>
    %222 = arith.addf %219, %221 : vector<2x1xf32>
    %223 = vector.broadcast %9 : f32 to vector<2x1xf32>
    %224 = arith.mulf %223, %166 : vector<2x1xf32>
    %225 = arith.addf %222, %224 : vector<2x1xf32>
    %226 = vector.broadcast %29 : f32 to vector<2x1xf32>
    %227 = arith.mulf %226, %167 : vector<2x1xf32>
    %228 = vector.broadcast %30 : f32 to vector<2x1xf32>
    %229 = arith.mulf %228, %168 : vector<2x1xf32>
    %230 = arith.addf %227, %229 : vector<2x1xf32>
    %231 = vector.broadcast %10 : f32 to vector<2x1xf32>
    %232 = arith.mulf %231, %86 : vector<2x1xf32>
    %233 = arith.addf %230, %232 : vector<2x1xf32>
    %234 = vector.broadcast %11 : f32 to vector<2x1xf32>
    %235 = arith.mulf %234, %106 : vector<2x1xf32>
    %236 = arith.addf %233, %235 : vector<2x1xf32>
    %237 = vector.broadcast %12 : f32 to vector<2x1xf32>
    %238 = arith.mulf %237, %126 : vector<2x1xf32>
    %239 = arith.addf %236, %238 : vector<2x1xf32>
    %240 = vector.broadcast %13 : f32 to vector<2x1xf32>
    %241 = arith.mulf %240, %146 : vector<2x1xf32>
    %242 = arith.addf %239, %241 : vector<2x1xf32>
    %243 = vector.broadcast %14 : f32 to vector<2x1xf32>
    %244 = arith.mulf %243, %166 : vector<2x1xf32>
    %245 = arith.addf %242, %244 : vector<2x1xf32>
    %246 = vector.broadcast %31 : f32 to vector<2x1xf32>
    %247 = arith.mulf %246, %167 : vector<2x1xf32>
    %248 = vector.broadcast %32 : f32 to vector<2x1xf32>
    %249 = arith.mulf %248, %168 : vector<2x1xf32>
    %250 = arith.addf %247, %249 : vector<2x1xf32>
    %251 = vector.broadcast %15 : f32 to vector<2x1xf32>
    %252 = arith.mulf %251, %86 : vector<2x1xf32>
    %253 = arith.addf %250, %252 : vector<2x1xf32>
    %254 = vector.broadcast %16 : f32 to vector<2x1xf32>
    %255 = arith.mulf %254, %106 : vector<2x1xf32>
    %256 = arith.addf %253, %255 : vector<2x1xf32>
    %257 = vector.broadcast %17 : f32 to vector<2x1xf32>
    %258 = arith.mulf %257, %126 : vector<2x1xf32>
    %259 = arith.addf %256, %258 : vector<2x1xf32>
    %260 = vector.broadcast %18 : f32 to vector<2x1xf32>
    %261 = arith.mulf %260, %146 : vector<2x1xf32>
    %262 = arith.addf %259, %261 : vector<2x1xf32>
    %263 = vector.broadcast %19 : f32 to vector<2x1xf32>
    %264 = arith.mulf %263, %166 : vector<2x1xf32>
    %265 = arith.addf %262, %264 : vector<2x1xf32>
    %266 = vector.broadcast %33 : f32 to vector<2x1xf32>
    %267 = arith.mulf %266, %167 : vector<2x1xf32>
    %268 = vector.broadcast %34 : f32 to vector<2x1xf32>
    %269 = arith.mulf %268, %168 : vector<2x1xf32>
    %270 = arith.addf %267, %269 : vector<2x1xf32>
    %271 = vector.broadcast %20 : f32 to vector<2x1xf32>
    %272 = arith.mulf %271, %86 : vector<2x1xf32>
    %273 = arith.addf %270, %272 : vector<2x1xf32>
    %274 = vector.broadcast %21 : f32 to vector<2x1xf32>
    %275 = arith.mulf %274, %106 : vector<2x1xf32>
    %276 = arith.addf %273, %275 : vector<2x1xf32>
    %277 = vector.broadcast %22 : f32 to vector<2x1xf32>
    %278 = arith.mulf %277, %126 : vector<2x1xf32>
    %279 = arith.addf %276, %278 : vector<2x1xf32>
    %280 = vector.broadcast %23 : f32 to vector<2x1xf32>
    %281 = arith.mulf %280, %146 : vector<2x1xf32>
    %282 = arith.addf %279, %281 : vector<2x1xf32>
    %283 = vector.broadcast %24 : f32 to vector<2x1xf32>
    %284 = arith.mulf %283, %166 : vector<2x1xf32>
    %285 = arith.addf %282, %284 : vector<2x1xf32>
    %286 = vector.extract_strided_slice %41 {offsets = [0, 2], sizes = [2, 1], strides = [1, 1]} : vector<2x8xf32> to vector<2x1xf32>
    %287 = vector.extract_strided_slice %42 {offsets = [0, 2], sizes = [2, 1], strides = [1, 1]} : vector<2x8xf32> to vector<2x1xf32>
    %288 = vector.broadcast %40 : f32 to vector<2x1xf32>
    %289 = arith.mulf %288, %286 : vector<2x1xf32>
    %290 = vector.broadcast %35 : f32 to vector<2x1xf32>
    %291 = arith.mulf %290, %205 : vector<2x1xf32>
    %292 = arith.addf %289, %291 : vector<2x1xf32>
    %293 = vector.broadcast %36 : f32 to vector<2x1xf32>
    %294 = arith.mulf %293, %225 : vector<2x1xf32>
    %295 = arith.addf %292, %294 : vector<2x1xf32>
    %296 = vector.broadcast %37 : f32 to vector<2x1xf32>
    %297 = arith.mulf %296, %245 : vector<2x1xf32>
    %298 = arith.addf %295, %297 : vector<2x1xf32>
    %299 = vector.broadcast %38 : f32 to vector<2x1xf32>
    %300 = arith.mulf %299, %265 : vector<2x1xf32>
    %301 = arith.addf %298, %300 : vector<2x1xf32>
    %302 = vector.broadcast %39 : f32 to vector<2x1xf32>
    %303 = arith.mulf %302, %285 : vector<2x1xf32>
    %304 = arith.addf %301, %303 : vector<2x1xf32>
    %305 = vector.broadcast %25 : f32 to vector<2x1xf32>
    %306 = arith.mulf %305, %286 : vector<2x1xf32>
    %307 = vector.broadcast %26 : f32 to vector<2x1xf32>
    %308 = arith.mulf %307, %287 : vector<2x1xf32>
    %309 = arith.addf %306, %308 : vector<2x1xf32>
    %310 = vector.broadcast %0 : f32 to vector<2x1xf32>
    %311 = arith.mulf %310, %205 : vector<2x1xf32>
    %312 = arith.addf %309, %311 : vector<2x1xf32>
    %313 = vector.broadcast %1 : f32 to vector<2x1xf32>
    %314 = arith.mulf %313, %225 : vector<2x1xf32>
    %315 = arith.addf %312, %314 : vector<2x1xf32>
    %316 = vector.broadcast %2 : f32 to vector<2x1xf32>
    %317 = arith.mulf %316, %245 : vector<2x1xf32>
    %318 = arith.addf %315, %317 : vector<2x1xf32>
    %319 = vector.broadcast %3 : f32 to vector<2x1xf32>
    %320 = arith.mulf %319, %265 : vector<2x1xf32>
    %321 = arith.addf %318, %320 : vector<2x1xf32>
    %322 = vector.broadcast %4 : f32 to vector<2x1xf32>
    %323 = arith.mulf %322, %285 : vector<2x1xf32>
    %324 = arith.addf %321, %323 : vector<2x1xf32>
    %325 = vector.broadcast %27 : f32 to vector<2x1xf32>
    %326 = arith.mulf %325, %286 : vector<2x1xf32>
    %327 = vector.broadcast %28 : f32 to vector<2x1xf32>
    %328 = arith.mulf %327, %287 : vector<2x1xf32>
    %329 = arith.addf %326, %328 : vector<2x1xf32>
    %330 = vector.broadcast %5 : f32 to vector<2x1xf32>
    %331 = arith.mulf %330, %205 : vector<2x1xf32>
    %332 = arith.addf %329, %331 : vector<2x1xf32>
    %333 = vector.broadcast %6 : f32 to vector<2x1xf32>
    %334 = arith.mulf %333, %225 : vector<2x1xf32>
    %335 = arith.addf %332, %334 : vector<2x1xf32>
    %336 = vector.broadcast %7 : f32 to vector<2x1xf32>
    %337 = arith.mulf %336, %245 : vector<2x1xf32>
    %338 = arith.addf %335, %337 : vector<2x1xf32>
    %339 = vector.broadcast %8 : f32 to vector<2x1xf32>
    %340 = arith.mulf %339, %265 : vector<2x1xf32>
    %341 = arith.addf %338, %340 : vector<2x1xf32>
    %342 = vector.broadcast %9 : f32 to vector<2x1xf32>
    %343 = arith.mulf %342, %285 : vector<2x1xf32>
    %344 = arith.addf %341, %343 : vector<2x1xf32>
    %345 = vector.broadcast %29 : f32 to vector<2x1xf32>
    %346 = arith.mulf %345, %286 : vector<2x1xf32>
    %347 = vector.broadcast %30 : f32 to vector<2x1xf32>
    %348 = arith.mulf %347, %287 : vector<2x1xf32>
    %349 = arith.addf %346, %348 : vector<2x1xf32>
    %350 = vector.broadcast %10 : f32 to vector<2x1xf32>
    %351 = arith.mulf %350, %205 : vector<2x1xf32>
    %352 = arith.addf %349, %351 : vector<2x1xf32>
    %353 = vector.broadcast %11 : f32 to vector<2x1xf32>
    %354 = arith.mulf %353, %225 : vector<2x1xf32>
    %355 = arith.addf %352, %354 : vector<2x1xf32>
    %356 = vector.broadcast %12 : f32 to vector<2x1xf32>
    %357 = arith.mulf %356, %245 : vector<2x1xf32>
    %358 = arith.addf %355, %357 : vector<2x1xf32>
    %359 = vector.broadcast %13 : f32 to vector<2x1xf32>
    %360 = arith.mulf %359, %265 : vector<2x1xf32>
    %361 = arith.addf %358, %360 : vector<2x1xf32>
    %362 = vector.broadcast %14 : f32 to vector<2x1xf32>
    %363 = arith.mulf %362, %285 : vector<2x1xf32>
    %364 = arith.addf %361, %363 : vector<2x1xf32>
    %365 = vector.broadcast %31 : f32 to vector<2x1xf32>
    %366 = arith.mulf %365, %286 : vector<2x1xf32>
    %367 = vector.broadcast %32 : f32 to vector<2x1xf32>
    %368 = arith.mulf %367, %287 : vector<2x1xf32>
    %369 = arith.addf %366, %368 : vector<2x1xf32>
    %370 = vector.broadcast %15 : f32 to vector<2x1xf32>
    %371 = arith.mulf %370, %205 : vector<2x1xf32>
    %372 = arith.addf %369, %371 : vector<2x1xf32>
    %373 = vector.broadcast %16 : f32 to vector<2x1xf32>
    %374 = arith.mulf %373, %225 : vector<2x1xf32>
    %375 = arith.addf %372, %374 : vector<2x1xf32>
    %376 = vector.broadcast %17 : f32 to vector<2x1xf32>
    %377 = arith.mulf %376, %245 : vector<2x1xf32>
    %378 = arith.addf %375, %377 : vector<2x1xf32>
    %379 = vector.broadcast %18 : f32 to vector<2x1xf32>
    %380 = arith.mulf %379, %265 : vector<2x1xf32>
    %381 = arith.addf %378, %380 : vector<2x1xf32>
    %382 = vector.broadcast %19 : f32 to vector<2x1xf32>
    %383 = arith.mulf %382, %285 : vector<2x1xf32>
    %384 = arith.addf %381, %383 : vector<2x1xf32>
    %385 = vector.broadcast %33 : f32 to vector<2x1xf32>
    %386 = arith.mulf %385, %286 : vector<2x1xf32>
    %387 = vector.broadcast %34 : f32 to vector<2x1xf32>
    %388 = arith.mulf %387, %287 : vector<2x1xf32>
    %389 = arith.addf %386, %388 : vector<2x1xf32>
    %390 = vector.broadcast %20 : f32 to vector<2x1xf32>
    %391 = arith.mulf %390, %205 : vector<2x1xf32>
    %392 = arith.addf %389, %391 : vector<2x1xf32>
    %393 = vector.broadcast %21 : f32 to vector<2x1xf32>
    %394 = arith.mulf %393, %225 : vector<2x1xf32>
    %395 = arith.addf %392, %394 : vector<2x1xf32>
    %396 = vector.broadcast %22 : f32 to vector<2x1xf32>
    %397 = arith.mulf %396, %245 : vector<2x1xf32>
    %398 = arith.addf %395, %397 : vector<2x1xf32>
    %399 = vector.broadcast %23 : f32 to vector<2x1xf32>
    %400 = arith.mulf %399, %265 : vector<2x1xf32>
    %401 = arith.addf %398, %400 : vector<2x1xf32>
    %402 = vector.broadcast %24 : f32 to vector<2x1xf32>
    %403 = arith.mulf %402, %285 : vector<2x1xf32>
    %404 = arith.addf %401, %403 : vector<2x1xf32>
    %405 = vector.extract_strided_slice %41 {offsets = [0, 3], sizes = [2, 1], strides = [1, 1]} : vector<2x8xf32> to vector<2x1xf32>
    %406 = vector.extract_strided_slice %42 {offsets = [0, 3], sizes = [2, 1], strides = [1, 1]} : vector<2x8xf32> to vector<2x1xf32>
    %407 = vector.broadcast %40 : f32 to vector<2x1xf32>
    %408 = arith.mulf %407, %405 : vector<2x1xf32>
    %409 = vector.broadcast %35 : f32 to vector<2x1xf32>
    %410 = arith.mulf %409, %324 : vector<2x1xf32>
    %411 = arith.addf %408, %410 : vector<2x1xf32>
    %412 = vector.broadcast %36 : f32 to vector<2x1xf32>
    %413 = arith.mulf %412, %344 : vector<2x1xf32>
    %414 = arith.addf %411, %413 : vector<2x1xf32>
    %415 = vector.broadcast %37 : f32 to vector<2x1xf32>
    %416 = arith.mulf %415, %364 : vector<2x1xf32>
    %417 = arith.addf %414, %416 : vector<2x1xf32>
    %418 = vector.broadcast %38 : f32 to vector<2x1xf32>
    %419 = arith.mulf %418, %384 : vector<2x1xf32>
    %420 = arith.addf %417, %419 : vector<2x1xf32>
    %421 = vector.broadcast %39 : f32 to vector<2x1xf32>
    %422 = arith.mulf %421, %404 : vector<2x1xf32>
    %423 = arith.addf %420, %422 : vector<2x1xf32>
    %424 = vector.broadcast %25 : f32 to vector<2x1xf32>
    %425 = arith.mulf %424, %405 : vector<2x1xf32>
    %426 = vector.broadcast %26 : f32 to vector<2x1xf32>
    %427 = arith.mulf %426, %406 : vector<2x1xf32>
    %428 = arith.addf %425, %427 : vector<2x1xf32>
    %429 = vector.broadcast %0 : f32 to vector<2x1xf32>
    %430 = arith.mulf %429, %324 : vector<2x1xf32>
    %431 = arith.addf %428, %430 : vector<2x1xf32>
    %432 = vector.broadcast %1 : f32 to vector<2x1xf32>
    %433 = arith.mulf %432, %344 : vector<2x1xf32>
    %434 = arith.addf %431, %433 : vector<2x1xf32>
    %435 = vector.broadcast %2 : f32 to vector<2x1xf32>
    %436 = arith.mulf %435, %364 : vector<2x1xf32>
    %437 = arith.addf %434, %436 : vector<2x1xf32>
    %438 = vector.broadcast %3 : f32 to vector<2x1xf32>
    %439 = arith.mulf %438, %384 : vector<2x1xf32>
    %440 = arith.addf %437, %439 : vector<2x1xf32>
    %441 = vector.broadcast %4 : f32 to vector<2x1xf32>
    %442 = arith.mulf %441, %404 : vector<2x1xf32>
    %443 = arith.addf %440, %442 : vector<2x1xf32>
    %444 = vector.broadcast %27 : f32 to vector<2x1xf32>
    %445 = arith.mulf %444, %405 : vector<2x1xf32>
    %446 = vector.broadcast %28 : f32 to vector<2x1xf32>
    %447 = arith.mulf %446, %406 : vector<2x1xf32>
    %448 = arith.addf %445, %447 : vector<2x1xf32>
    %449 = vector.broadcast %5 : f32 to vector<2x1xf32>
    %450 = arith.mulf %449, %324 : vector<2x1xf32>
    %451 = arith.addf %448, %450 : vector<2x1xf32>
    %452 = vector.broadcast %6 : f32 to vector<2x1xf32>
    %453 = arith.mulf %452, %344 : vector<2x1xf32>
    %454 = arith.addf %451, %453 : vector<2x1xf32>
    %455 = vector.broadcast %7 : f32 to vector<2x1xf32>
    %456 = arith.mulf %455, %364 : vector<2x1xf32>
    %457 = arith.addf %454, %456 : vector<2x1xf32>
    %458 = vector.broadcast %8 : f32 to vector<2x1xf32>
    %459 = arith.mulf %458, %384 : vector<2x1xf32>
    %460 = arith.addf %457, %459 : vector<2x1xf32>
    %461 = vector.broadcast %9 : f32 to vector<2x1xf32>
    %462 = arith.mulf %461, %404 : vector<2x1xf32>
    %463 = arith.addf %460, %462 : vector<2x1xf32>
    %464 = vector.broadcast %29 : f32 to vector<2x1xf32>
    %465 = arith.mulf %464, %405 : vector<2x1xf32>
    %466 = vector.broadcast %30 : f32 to vector<2x1xf32>
    %467 = arith.mulf %466, %406 : vector<2x1xf32>
    %468 = arith.addf %465, %467 : vector<2x1xf32>
    %469 = vector.broadcast %10 : f32 to vector<2x1xf32>
    %470 = arith.mulf %469, %324 : vector<2x1xf32>
    %471 = arith.addf %468, %470 : vector<2x1xf32>
    %472 = vector.broadcast %11 : f32 to vector<2x1xf32>
    %473 = arith.mulf %472, %344 : vector<2x1xf32>
    %474 = arith.addf %471, %473 : vector<2x1xf32>
    %475 = vector.broadcast %12 : f32 to vector<2x1xf32>
    %476 = arith.mulf %475, %364 : vector<2x1xf32>
    %477 = arith.addf %474, %476 : vector<2x1xf32>
    %478 = vector.broadcast %13 : f32 to vector<2x1xf32>
    %479 = arith.mulf %478, %384 : vector<2x1xf32>
    %480 = arith.addf %477, %479 : vector<2x1xf32>
    %481 = vector.broadcast %14 : f32 to vector<2x1xf32>
    %482 = arith.mulf %481, %404 : vector<2x1xf32>
    %483 = arith.addf %480, %482 : vector<2x1xf32>
    %484 = vector.broadcast %31 : f32 to vector<2x1xf32>
    %485 = arith.mulf %484, %405 : vector<2x1xf32>
    %486 = vector.broadcast %32 : f32 to vector<2x1xf32>
    %487 = arith.mulf %486, %406 : vector<2x1xf32>
    %488 = arith.addf %485, %487 : vector<2x1xf32>
    %489 = vector.broadcast %15 : f32 to vector<2x1xf32>
    %490 = arith.mulf %489, %324 : vector<2x1xf32>
    %491 = arith.addf %488, %490 : vector<2x1xf32>
    %492 = vector.broadcast %16 : f32 to vector<2x1xf32>
    %493 = arith.mulf %492, %344 : vector<2x1xf32>
    %494 = arith.addf %491, %493 : vector<2x1xf32>
    %495 = vector.broadcast %17 : f32 to vector<2x1xf32>
    %496 = arith.mulf %495, %364 : vector<2x1xf32>
    %497 = arith.addf %494, %496 : vector<2x1xf32>
    %498 = vector.broadcast %18 : f32 to vector<2x1xf32>
    %499 = arith.mulf %498, %384 : vector<2x1xf32>
    %500 = arith.addf %497, %499 : vector<2x1xf32>
    %501 = vector.broadcast %19 : f32 to vector<2x1xf32>
    %502 = arith.mulf %501, %404 : vector<2x1xf32>
    %503 = arith.addf %500, %502 : vector<2x1xf32>
    %504 = vector.broadcast %33 : f32 to vector<2x1xf32>
    %505 = arith.mulf %504, %405 : vector<2x1xf32>
    %506 = vector.broadcast %34 : f32 to vector<2x1xf32>
    %507 = arith.mulf %506, %406 : vector<2x1xf32>
    %508 = arith.addf %505, %507 : vector<2x1xf32>
    %509 = vector.broadcast %20 : f32 to vector<2x1xf32>
    %510 = arith.mulf %509, %324 : vector<2x1xf32>
    %511 = arith.addf %508, %510 : vector<2x1xf32>
    %512 = vector.broadcast %21 : f32 to vector<2x1xf32>
    %513 = arith.mulf %512, %344 : vector<2x1xf32>
    %514 = arith.addf %511, %513 : vector<2x1xf32>
    %515 = vector.broadcast %22 : f32 to vector<2x1xf32>
    %516 = arith.mulf %515, %364 : vector<2x1xf32>
    %517 = arith.addf %514, %516 : vector<2x1xf32>
    %518 = vector.broadcast %23 : f32 to vector<2x1xf32>
    %519 = arith.mulf %518, %384 : vector<2x1xf32>
    %520 = arith.addf %517, %519 : vector<2x1xf32>
    %521 = vector.broadcast %24 : f32 to vector<2x1xf32>
    %522 = arith.mulf %521, %404 : vector<2x1xf32>
    %523 = arith.addf %520, %522 : vector<2x1xf32>
    %524 = vector.extract_strided_slice %41 {offsets = [0, 4], sizes = [2, 1], strides = [1, 1]} : vector<2x8xf32> to vector<2x1xf32>
    %525 = vector.extract_strided_slice %42 {offsets = [0, 4], sizes = [2, 1], strides = [1, 1]} : vector<2x8xf32> to vector<2x1xf32>
    %526 = vector.broadcast %40 : f32 to vector<2x1xf32>
    %527 = arith.mulf %526, %524 : vector<2x1xf32>
    %528 = vector.broadcast %35 : f32 to vector<2x1xf32>
    %529 = arith.mulf %528, %443 : vector<2x1xf32>
    %530 = arith.addf %527, %529 : vector<2x1xf32>
    %531 = vector.broadcast %36 : f32 to vector<2x1xf32>
    %532 = arith.mulf %531, %463 : vector<2x1xf32>
    %533 = arith.addf %530, %532 : vector<2x1xf32>
    %534 = vector.broadcast %37 : f32 to vector<2x1xf32>
    %535 = arith.mulf %534, %483 : vector<2x1xf32>
    %536 = arith.addf %533, %535 : vector<2x1xf32>
    %537 = vector.broadcast %38 : f32 to vector<2x1xf32>
    %538 = arith.mulf %537, %503 : vector<2x1xf32>
    %539 = arith.addf %536, %538 : vector<2x1xf32>
    %540 = vector.broadcast %39 : f32 to vector<2x1xf32>
    %541 = arith.mulf %540, %523 : vector<2x1xf32>
    %542 = arith.addf %539, %541 : vector<2x1xf32>
    %543 = vector.broadcast %25 : f32 to vector<2x1xf32>
    %544 = arith.mulf %543, %524 : vector<2x1xf32>
    %545 = vector.broadcast %26 : f32 to vector<2x1xf32>
    %546 = arith.mulf %545, %525 : vector<2x1xf32>
    %547 = arith.addf %544, %546 : vector<2x1xf32>
    %548 = vector.broadcast %0 : f32 to vector<2x1xf32>
    %549 = arith.mulf %548, %443 : vector<2x1xf32>
    %550 = arith.addf %547, %549 : vector<2x1xf32>
    %551 = vector.broadcast %1 : f32 to vector<2x1xf32>
    %552 = arith.mulf %551, %463 : vector<2x1xf32>
    %553 = arith.addf %550, %552 : vector<2x1xf32>
    %554 = vector.broadcast %2 : f32 to vector<2x1xf32>
    %555 = arith.mulf %554, %483 : vector<2x1xf32>
    %556 = arith.addf %553, %555 : vector<2x1xf32>
    %557 = vector.broadcast %3 : f32 to vector<2x1xf32>
    %558 = arith.mulf %557, %503 : vector<2x1xf32>
    %559 = arith.addf %556, %558 : vector<2x1xf32>
    %560 = vector.broadcast %4 : f32 to vector<2x1xf32>
    %561 = arith.mulf %560, %523 : vector<2x1xf32>
    %562 = arith.addf %559, %561 : vector<2x1xf32>
    %563 = vector.broadcast %27 : f32 to vector<2x1xf32>
    %564 = arith.mulf %563, %524 : vector<2x1xf32>
    %565 = vector.broadcast %28 : f32 to vector<2x1xf32>
    %566 = arith.mulf %565, %525 : vector<2x1xf32>
    %567 = arith.addf %564, %566 : vector<2x1xf32>
    %568 = vector.broadcast %5 : f32 to vector<2x1xf32>
    %569 = arith.mulf %568, %443 : vector<2x1xf32>
    %570 = arith.addf %567, %569 : vector<2x1xf32>
    %571 = vector.broadcast %6 : f32 to vector<2x1xf32>
    %572 = arith.mulf %571, %463 : vector<2x1xf32>
    %573 = arith.addf %570, %572 : vector<2x1xf32>
    %574 = vector.broadcast %7 : f32 to vector<2x1xf32>
    %575 = arith.mulf %574, %483 : vector<2x1xf32>
    %576 = arith.addf %573, %575 : vector<2x1xf32>
    %577 = vector.broadcast %8 : f32 to vector<2x1xf32>
    %578 = arith.mulf %577, %503 : vector<2x1xf32>
    %579 = arith.addf %576, %578 : vector<2x1xf32>
    %580 = vector.broadcast %9 : f32 to vector<2x1xf32>
    %581 = arith.mulf %580, %523 : vector<2x1xf32>
    %582 = arith.addf %579, %581 : vector<2x1xf32>
    %583 = vector.broadcast %29 : f32 to vector<2x1xf32>
    %584 = arith.mulf %583, %524 : vector<2x1xf32>
    %585 = vector.broadcast %30 : f32 to vector<2x1xf32>
    %586 = arith.mulf %585, %525 : vector<2x1xf32>
    %587 = arith.addf %584, %586 : vector<2x1xf32>
    %588 = vector.broadcast %10 : f32 to vector<2x1xf32>
    %589 = arith.mulf %588, %443 : vector<2x1xf32>
    %590 = arith.addf %587, %589 : vector<2x1xf32>
    %591 = vector.broadcast %11 : f32 to vector<2x1xf32>
    %592 = arith.mulf %591, %463 : vector<2x1xf32>
    %593 = arith.addf %590, %592 : vector<2x1xf32>
    %594 = vector.broadcast %12 : f32 to vector<2x1xf32>
    %595 = arith.mulf %594, %483 : vector<2x1xf32>
    %596 = arith.addf %593, %595 : vector<2x1xf32>
    %597 = vector.broadcast %13 : f32 to vector<2x1xf32>
    %598 = arith.mulf %597, %503 : vector<2x1xf32>
    %599 = arith.addf %596, %598 : vector<2x1xf32>
    %600 = vector.broadcast %14 : f32 to vector<2x1xf32>
    %601 = arith.mulf %600, %523 : vector<2x1xf32>
    %602 = arith.addf %599, %601 : vector<2x1xf32>
    %603 = vector.broadcast %31 : f32 to vector<2x1xf32>
    %604 = arith.mulf %603, %524 : vector<2x1xf32>
    %605 = vector.broadcast %32 : f32 to vector<2x1xf32>
    %606 = arith.mulf %605, %525 : vector<2x1xf32>
    %607 = arith.addf %604, %606 : vector<2x1xf32>
    %608 = vector.broadcast %15 : f32 to vector<2x1xf32>
    %609 = arith.mulf %608, %443 : vector<2x1xf32>
    %610 = arith.addf %607, %609 : vector<2x1xf32>
    %611 = vector.broadcast %16 : f32 to vector<2x1xf32>
    %612 = arith.mulf %611, %463 : vector<2x1xf32>
    %613 = arith.addf %610, %612 : vector<2x1xf32>
    %614 = vector.broadcast %17 : f32 to vector<2x1xf32>
    %615 = arith.mulf %614, %483 : vector<2x1xf32>
    %616 = arith.addf %613, %615 : vector<2x1xf32>
    %617 = vector.broadcast %18 : f32 to vector<2x1xf32>
    %618 = arith.mulf %617, %503 : vector<2x1xf32>
    %619 = arith.addf %616, %618 : vector<2x1xf32>
    %620 = vector.broadcast %19 : f32 to vector<2x1xf32>
    %621 = arith.mulf %620, %523 : vector<2x1xf32>
    %622 = arith.addf %619, %621 : vector<2x1xf32>
    %623 = vector.broadcast %33 : f32 to vector<2x1xf32>
    %624 = arith.mulf %623, %524 : vector<2x1xf32>
    %625 = vector.broadcast %34 : f32 to vector<2x1xf32>
    %626 = arith.mulf %625, %525 : vector<2x1xf32>
    %627 = arith.addf %624, %626 : vector<2x1xf32>
    %628 = vector.broadcast %20 : f32 to vector<2x1xf32>
    %629 = arith.mulf %628, %443 : vector<2x1xf32>
    %630 = arith.addf %627, %629 : vector<2x1xf32>
    %631 = vector.broadcast %21 : f32 to vector<2x1xf32>
    %632 = arith.mulf %631, %463 : vector<2x1xf32>
    %633 = arith.addf %630, %632 : vector<2x1xf32>
    %634 = vector.broadcast %22 : f32 to vector<2x1xf32>
    %635 = arith.mulf %634, %483 : vector<2x1xf32>
    %636 = arith.addf %633, %635 : vector<2x1xf32>
    %637 = vector.broadcast %23 : f32 to vector<2x1xf32>
    %638 = arith.mulf %637, %503 : vector<2x1xf32>
    %639 = arith.addf %636, %638 : vector<2x1xf32>
    %640 = vector.broadcast %24 : f32 to vector<2x1xf32>
    %641 = arith.mulf %640, %523 : vector<2x1xf32>
    %642 = arith.addf %639, %641 : vector<2x1xf32>
    %643 = vector.extract_strided_slice %41 {offsets = [0, 5], sizes = [2, 1], strides = [1, 1]} : vector<2x8xf32> to vector<2x1xf32>
    %644 = vector.extract_strided_slice %42 {offsets = [0, 5], sizes = [2, 1], strides = [1, 1]} : vector<2x8xf32> to vector<2x1xf32>
    %645 = vector.broadcast %40 : f32 to vector<2x1xf32>
    %646 = arith.mulf %645, %643 : vector<2x1xf32>
    %647 = vector.broadcast %35 : f32 to vector<2x1xf32>
    %648 = arith.mulf %647, %562 : vector<2x1xf32>
    %649 = arith.addf %646, %648 : vector<2x1xf32>
    %650 = vector.broadcast %36 : f32 to vector<2x1xf32>
    %651 = arith.mulf %650, %582 : vector<2x1xf32>
    %652 = arith.addf %649, %651 : vector<2x1xf32>
    %653 = vector.broadcast %37 : f32 to vector<2x1xf32>
    %654 = arith.mulf %653, %602 : vector<2x1xf32>
    %655 = arith.addf %652, %654 : vector<2x1xf32>
    %656 = vector.broadcast %38 : f32 to vector<2x1xf32>
    %657 = arith.mulf %656, %622 : vector<2x1xf32>
    %658 = arith.addf %655, %657 : vector<2x1xf32>
    %659 = vector.broadcast %39 : f32 to vector<2x1xf32>
    %660 = arith.mulf %659, %642 : vector<2x1xf32>
    %661 = arith.addf %658, %660 : vector<2x1xf32>
    %662 = vector.broadcast %25 : f32 to vector<2x1xf32>
    %663 = arith.mulf %662, %643 : vector<2x1xf32>
    %664 = vector.broadcast %26 : f32 to vector<2x1xf32>
    %665 = arith.mulf %664, %644 : vector<2x1xf32>
    %666 = arith.addf %663, %665 : vector<2x1xf32>
    %667 = vector.broadcast %0 : f32 to vector<2x1xf32>
    %668 = arith.mulf %667, %562 : vector<2x1xf32>
    %669 = arith.addf %666, %668 : vector<2x1xf32>
    %670 = vector.broadcast %1 : f32 to vector<2x1xf32>
    %671 = arith.mulf %670, %582 : vector<2x1xf32>
    %672 = arith.addf %669, %671 : vector<2x1xf32>
    %673 = vector.broadcast %2 : f32 to vector<2x1xf32>
    %674 = arith.mulf %673, %602 : vector<2x1xf32>
    %675 = arith.addf %672, %674 : vector<2x1xf32>
    %676 = vector.broadcast %3 : f32 to vector<2x1xf32>
    %677 = arith.mulf %676, %622 : vector<2x1xf32>
    %678 = arith.addf %675, %677 : vector<2x1xf32>
    %679 = vector.broadcast %4 : f32 to vector<2x1xf32>
    %680 = arith.mulf %679, %642 : vector<2x1xf32>
    %681 = arith.addf %678, %680 : vector<2x1xf32>
    %682 = vector.broadcast %27 : f32 to vector<2x1xf32>
    %683 = arith.mulf %682, %643 : vector<2x1xf32>
    %684 = vector.broadcast %28 : f32 to vector<2x1xf32>
    %685 = arith.mulf %684, %644 : vector<2x1xf32>
    %686 = arith.addf %683, %685 : vector<2x1xf32>
    %687 = vector.broadcast %5 : f32 to vector<2x1xf32>
    %688 = arith.mulf %687, %562 : vector<2x1xf32>
    %689 = arith.addf %686, %688 : vector<2x1xf32>
    %690 = vector.broadcast %6 : f32 to vector<2x1xf32>
    %691 = arith.mulf %690, %582 : vector<2x1xf32>
    %692 = arith.addf %689, %691 : vector<2x1xf32>
    %693 = vector.broadcast %7 : f32 to vector<2x1xf32>
    %694 = arith.mulf %693, %602 : vector<2x1xf32>
    %695 = arith.addf %692, %694 : vector<2x1xf32>
    %696 = vector.broadcast %8 : f32 to vector<2x1xf32>
    %697 = arith.mulf %696, %622 : vector<2x1xf32>
    %698 = arith.addf %695, %697 : vector<2x1xf32>
    %699 = vector.broadcast %9 : f32 to vector<2x1xf32>
    %700 = arith.mulf %699, %642 : vector<2x1xf32>
    %701 = arith.addf %698, %700 : vector<2x1xf32>
    %702 = vector.broadcast %29 : f32 to vector<2x1xf32>
    %703 = arith.mulf %702, %643 : vector<2x1xf32>
    %704 = vector.broadcast %30 : f32 to vector<2x1xf32>
    %705 = arith.mulf %704, %644 : vector<2x1xf32>
    %706 = arith.addf %703, %705 : vector<2x1xf32>
    %707 = vector.broadcast %10 : f32 to vector<2x1xf32>
    %708 = arith.mulf %707, %562 : vector<2x1xf32>
    %709 = arith.addf %706, %708 : vector<2x1xf32>
    %710 = vector.broadcast %11 : f32 to vector<2x1xf32>
    %711 = arith.mulf %710, %582 : vector<2x1xf32>
    %712 = arith.addf %709, %711 : vector<2x1xf32>
    %713 = vector.broadcast %12 : f32 to vector<2x1xf32>
    %714 = arith.mulf %713, %602 : vector<2x1xf32>
    %715 = arith.addf %712, %714 : vector<2x1xf32>
    %716 = vector.broadcast %13 : f32 to vector<2x1xf32>
    %717 = arith.mulf %716, %622 : vector<2x1xf32>
    %718 = arith.addf %715, %717 : vector<2x1xf32>
    %719 = vector.broadcast %14 : f32 to vector<2x1xf32>
    %720 = arith.mulf %719, %642 : vector<2x1xf32>
    %721 = arith.addf %718, %720 : vector<2x1xf32>
    %722 = vector.broadcast %31 : f32 to vector<2x1xf32>
    %723 = arith.mulf %722, %643 : vector<2x1xf32>
    %724 = vector.broadcast %32 : f32 to vector<2x1xf32>
    %725 = arith.mulf %724, %644 : vector<2x1xf32>
    %726 = arith.addf %723, %725 : vector<2x1xf32>
    %727 = vector.broadcast %15 : f32 to vector<2x1xf32>
    %728 = arith.mulf %727, %562 : vector<2x1xf32>
    %729 = arith.addf %726, %728 : vector<2x1xf32>
    %730 = vector.broadcast %16 : f32 to vector<2x1xf32>
    %731 = arith.mulf %730, %582 : vector<2x1xf32>
    %732 = arith.addf %729, %731 : vector<2x1xf32>
    %733 = vector.broadcast %17 : f32 to vector<2x1xf32>
    %734 = arith.mulf %733, %602 : vector<2x1xf32>
    %735 = arith.addf %732, %734 : vector<2x1xf32>
    %736 = vector.broadcast %18 : f32 to vector<2x1xf32>
    %737 = arith.mulf %736, %622 : vector<2x1xf32>
    %738 = arith.addf %735, %737 : vector<2x1xf32>
    %739 = vector.broadcast %19 : f32 to vector<2x1xf32>
    %740 = arith.mulf %739, %642 : vector<2x1xf32>
    %741 = arith.addf %738, %740 : vector<2x1xf32>
    %742 = vector.broadcast %33 : f32 to vector<2x1xf32>
    %743 = arith.mulf %742, %643 : vector<2x1xf32>
    %744 = vector.broadcast %34 : f32 to vector<2x1xf32>
    %745 = arith.mulf %744, %644 : vector<2x1xf32>
    %746 = arith.addf %743, %745 : vector<2x1xf32>
    %747 = vector.broadcast %20 : f32 to vector<2x1xf32>
    %748 = arith.mulf %747, %562 : vector<2x1xf32>
    %749 = arith.addf %746, %748 : vector<2x1xf32>
    %750 = vector.broadcast %21 : f32 to vector<2x1xf32>
    %751 = arith.mulf %750, %582 : vector<2x1xf32>
    %752 = arith.addf %749, %751 : vector<2x1xf32>
    %753 = vector.broadcast %22 : f32 to vector<2x1xf32>
    %754 = arith.mulf %753, %602 : vector<2x1xf32>
    %755 = arith.addf %752, %754 : vector<2x1xf32>
    %756 = vector.broadcast %23 : f32 to vector<2x1xf32>
    %757 = arith.mulf %756, %622 : vector<2x1xf32>
    %758 = arith.addf %755, %757 : vector<2x1xf32>
    %759 = vector.broadcast %24 : f32 to vector<2x1xf32>
    %760 = arith.mulf %759, %642 : vector<2x1xf32>
    %761 = arith.addf %758, %760 : vector<2x1xf32>
    %762 = vector.extract_strided_slice %41 {offsets = [0, 6], sizes = [2, 1], strides = [1, 1]} : vector<2x8xf32> to vector<2x1xf32>
    %763 = vector.extract_strided_slice %42 {offsets = [0, 6], sizes = [2, 1], strides = [1, 1]} : vector<2x8xf32> to vector<2x1xf32>
    %764 = vector.broadcast %40 : f32 to vector<2x1xf32>
    %765 = arith.mulf %764, %762 : vector<2x1xf32>
    %766 = vector.broadcast %35 : f32 to vector<2x1xf32>
    %767 = arith.mulf %766, %681 : vector<2x1xf32>
    %768 = arith.addf %765, %767 : vector<2x1xf32>
    %769 = vector.broadcast %36 : f32 to vector<2x1xf32>
    %770 = arith.mulf %769, %701 : vector<2x1xf32>
    %771 = arith.addf %768, %770 : vector<2x1xf32>
    %772 = vector.broadcast %37 : f32 to vector<2x1xf32>
    %773 = arith.mulf %772, %721 : vector<2x1xf32>
    %774 = arith.addf %771, %773 : vector<2x1xf32>
    %775 = vector.broadcast %38 : f32 to vector<2x1xf32>
    %776 = arith.mulf %775, %741 : vector<2x1xf32>
    %777 = arith.addf %774, %776 : vector<2x1xf32>
    %778 = vector.broadcast %39 : f32 to vector<2x1xf32>
    %779 = arith.mulf %778, %761 : vector<2x1xf32>
    %780 = arith.addf %777, %779 : vector<2x1xf32>
    %781 = vector.broadcast %25 : f32 to vector<2x1xf32>
    %782 = arith.mulf %781, %762 : vector<2x1xf32>
    %783 = vector.broadcast %26 : f32 to vector<2x1xf32>
    %784 = arith.mulf %783, %763 : vector<2x1xf32>
    %785 = arith.addf %782, %784 : vector<2x1xf32>
    %786 = vector.broadcast %0 : f32 to vector<2x1xf32>
    %787 = arith.mulf %786, %681 : vector<2x1xf32>
    %788 = arith.addf %785, %787 : vector<2x1xf32>
    %789 = vector.broadcast %1 : f32 to vector<2x1xf32>
    %790 = arith.mulf %789, %701 : vector<2x1xf32>
    %791 = arith.addf %788, %790 : vector<2x1xf32>
    %792 = vector.broadcast %2 : f32 to vector<2x1xf32>
    %793 = arith.mulf %792, %721 : vector<2x1xf32>
    %794 = arith.addf %791, %793 : vector<2x1xf32>
    %795 = vector.broadcast %3 : f32 to vector<2x1xf32>
    %796 = arith.mulf %795, %741 : vector<2x1xf32>
    %797 = arith.addf %794, %796 : vector<2x1xf32>
    %798 = vector.broadcast %4 : f32 to vector<2x1xf32>
    %799 = arith.mulf %798, %761 : vector<2x1xf32>
    %800 = arith.addf %797, %799 : vector<2x1xf32>
    %801 = vector.broadcast %27 : f32 to vector<2x1xf32>
    %802 = arith.mulf %801, %762 : vector<2x1xf32>
    %803 = vector.broadcast %28 : f32 to vector<2x1xf32>
    %804 = arith.mulf %803, %763 : vector<2x1xf32>
    %805 = arith.addf %802, %804 : vector<2x1xf32>
    %806 = vector.broadcast %5 : f32 to vector<2x1xf32>
    %807 = arith.mulf %806, %681 : vector<2x1xf32>
    %808 = arith.addf %805, %807 : vector<2x1xf32>
    %809 = vector.broadcast %6 : f32 to vector<2x1xf32>
    %810 = arith.mulf %809, %701 : vector<2x1xf32>
    %811 = arith.addf %808, %810 : vector<2x1xf32>
    %812 = vector.broadcast %7 : f32 to vector<2x1xf32>
    %813 = arith.mulf %812, %721 : vector<2x1xf32>
    %814 = arith.addf %811, %813 : vector<2x1xf32>
    %815 = vector.broadcast %8 : f32 to vector<2x1xf32>
    %816 = arith.mulf %815, %741 : vector<2x1xf32>
    %817 = arith.addf %814, %816 : vector<2x1xf32>
    %818 = vector.broadcast %9 : f32 to vector<2x1xf32>
    %819 = arith.mulf %818, %761 : vector<2x1xf32>
    %820 = arith.addf %817, %819 : vector<2x1xf32>
    %821 = vector.broadcast %29 : f32 to vector<2x1xf32>
    %822 = arith.mulf %821, %762 : vector<2x1xf32>
    %823 = vector.broadcast %30 : f32 to vector<2x1xf32>
    %824 = arith.mulf %823, %763 : vector<2x1xf32>
    %825 = arith.addf %822, %824 : vector<2x1xf32>
    %826 = vector.broadcast %10 : f32 to vector<2x1xf32>
    %827 = arith.mulf %826, %681 : vector<2x1xf32>
    %828 = arith.addf %825, %827 : vector<2x1xf32>
    %829 = vector.broadcast %11 : f32 to vector<2x1xf32>
    %830 = arith.mulf %829, %701 : vector<2x1xf32>
    %831 = arith.addf %828, %830 : vector<2x1xf32>
    %832 = vector.broadcast %12 : f32 to vector<2x1xf32>
    %833 = arith.mulf %832, %721 : vector<2x1xf32>
    %834 = arith.addf %831, %833 : vector<2x1xf32>
    %835 = vector.broadcast %13 : f32 to vector<2x1xf32>
    %836 = arith.mulf %835, %741 : vector<2x1xf32>
    %837 = arith.addf %834, %836 : vector<2x1xf32>
    %838 = vector.broadcast %14 : f32 to vector<2x1xf32>
    %839 = arith.mulf %838, %761 : vector<2x1xf32>
    %840 = arith.addf %837, %839 : vector<2x1xf32>
    %841 = vector.broadcast %31 : f32 to vector<2x1xf32>
    %842 = arith.mulf %841, %762 : vector<2x1xf32>
    %843 = vector.broadcast %32 : f32 to vector<2x1xf32>
    %844 = arith.mulf %843, %763 : vector<2x1xf32>
    %845 = arith.addf %842, %844 : vector<2x1xf32>
    %846 = vector.broadcast %15 : f32 to vector<2x1xf32>
    %847 = arith.mulf %846, %681 : vector<2x1xf32>
    %848 = arith.addf %845, %847 : vector<2x1xf32>
    %849 = vector.broadcast %16 : f32 to vector<2x1xf32>
    %850 = arith.mulf %849, %701 : vector<2x1xf32>
    %851 = arith.addf %848, %850 : vector<2x1xf32>
    %852 = vector.broadcast %17 : f32 to vector<2x1xf32>
    %853 = arith.mulf %852, %721 : vector<2x1xf32>
    %854 = arith.addf %851, %853 : vector<2x1xf32>
    %855 = vector.broadcast %18 : f32 to vector<2x1xf32>
    %856 = arith.mulf %855, %741 : vector<2x1xf32>
    %857 = arith.addf %854, %856 : vector<2x1xf32>
    %858 = vector.broadcast %19 : f32 to vector<2x1xf32>
    %859 = arith.mulf %858, %761 : vector<2x1xf32>
    %860 = arith.addf %857, %859 : vector<2x1xf32>
    %861 = vector.broadcast %33 : f32 to vector<2x1xf32>
    %862 = arith.mulf %861, %762 : vector<2x1xf32>
    %863 = vector.broadcast %34 : f32 to vector<2x1xf32>
    %864 = arith.mulf %863, %763 : vector<2x1xf32>
    %865 = arith.addf %862, %864 : vector<2x1xf32>
    %866 = vector.broadcast %20 : f32 to vector<2x1xf32>
    %867 = arith.mulf %866, %681 : vector<2x1xf32>
    %868 = arith.addf %865, %867 : vector<2x1xf32>
    %869 = vector.broadcast %21 : f32 to vector<2x1xf32>
    %870 = arith.mulf %869, %701 : vector<2x1xf32>
    %871 = arith.addf %868, %870 : vector<2x1xf32>
    %872 = vector.broadcast %22 : f32 to vector<2x1xf32>
    %873 = arith.mulf %872, %721 : vector<2x1xf32>
    %874 = arith.addf %871, %873 : vector<2x1xf32>
    %875 = vector.broadcast %23 : f32 to vector<2x1xf32>
    %876 = arith.mulf %875, %741 : vector<2x1xf32>
    %877 = arith.addf %874, %876 : vector<2x1xf32>
    %878 = vector.broadcast %24 : f32 to vector<2x1xf32>
    %879 = arith.mulf %878, %761 : vector<2x1xf32>
    %880 = arith.addf %877, %879 : vector<2x1xf32>
    %881 = vector.extract_strided_slice %41 {offsets = [0, 7], sizes = [2, 1], strides = [1, 1]} : vector<2x8xf32> to vector<2x1xf32>
    %882 = vector.broadcast %40 : f32 to vector<2x1xf32>
    %883 = arith.mulf %882, %881 : vector<2x1xf32>
    %884 = vector.broadcast %35 : f32 to vector<2x1xf32>
    %885 = arith.mulf %884, %800 : vector<2x1xf32>
    %886 = arith.addf %883, %885 : vector<2x1xf32>
    %887 = vector.broadcast %36 : f32 to vector<2x1xf32>
    %888 = arith.mulf %887, %820 : vector<2x1xf32>
    %889 = arith.addf %886, %888 : vector<2x1xf32>
    %890 = vector.broadcast %37 : f32 to vector<2x1xf32>
    %891 = arith.mulf %890, %840 : vector<2x1xf32>
    %892 = arith.addf %889, %891 : vector<2x1xf32>
    %893 = vector.broadcast %38 : f32 to vector<2x1xf32>
    %894 = arith.mulf %893, %860 : vector<2x1xf32>
    %895 = arith.addf %892, %894 : vector<2x1xf32>
    %896 = vector.broadcast %39 : f32 to vector<2x1xf32>
    %897 = arith.mulf %896, %880 : vector<2x1xf32>
    %898 = arith.addf %895, %897 : vector<2x1xf32>
    %899 = tpu.concatenate %66, %185, %304, %423, %542, %661, %780, %898 in 1 : vector<2x1xf32>, vector<2x1xf32>, vector<2x1xf32>, vector<2x1xf32>, vector<2x1xf32>, vector<2x1xf32>, vector<2x1xf32>, vector<2x1xf32> -> vector<2x8xf32>
    %900 = math.tanh %899 : vector<2x8xf32>
    %c0_8 = arith.constant 0 : index
    %c0_9 = arith.constant 0 : index
    %901 = vector.load %arg3[%c0_8, %c0_9] : memref<2x8xf32, #tpu.memory_space<vmem>>, vector<2x8xf32>
    tpu.vector_store %arg3[%c0_8, %c0_9], %900 {strides = array<i32>} : memref<2x8xf32, #tpu.memory_space<vmem>>, vector<2x8xf32>,
    return
  }
}

</mosaic_0001>

<llo_original>
// kernel: dsso_forward.1
$region0: #{dsso_forward.1}
  #allocation0 [shape = 'u32[]', space=smem, size = 0x4, offset = 0x4, fixed_abs, tag = 'smem constant byte address 0x4 - core index']
  #allocation1 [shape = 'u32[144,128]{1,0:T(1,128)}', space=vmem, size = 0x12000, scoped, tag = 'internal scratch']
  %s0 = inlined_call_operand.vmem [shape: f32[41], index: 0, kind: input, shape index: {}]
  %s1 = inlined_call_operand.vmem [shape: f32[2,8], index: 1, kind: input, shape index: {}]
  %s2 = inlined_call_operand.vmem [shape: f32[2,8], index: 2, kind: input, shape index: {}]
  %s3 = inlined_call_operand.hbm [shape: f32[2,8], index: 3, kind: output, shape index: {}]
  %s4 = sld [smem:[#allocation0]]
  $region26: #{dsso_forward.1} parent=0
    _
  %s6 = ssub.s32 1, %s4
  %s7 = scalar_select 0, %s6, %s4
  $region1: #{dsso_forward.1} parent=0
    #allocation2 [shape = 'u8[512]{0}', space=smem, size = 0x200, scoped, tag = 'input window, operand 0, single buffered']
    #allocation3 [shape = 's32[1]{0}', space=sflag, size = 0x4, scoped, tag = 'scoped memory for dsso_forward.1']
    #allocation4 [shape = 's32[1]{0}', space=sflag, size = 0x4, scoped, tag = 'scoped memory for dsso_forward.1']
    #allocation5 [shape = 'u8[1024]{0}', space=vmem, size = 0x400, scoped, tag = 'output window, operand 0, single buffered']
    %8 = vsyncpa [#allocation4], 0
    %9 = vsyncpa [#allocation3], 0
    // Predicated region
    $region2: #{dsso_forward.1} parent=1 // pred_check
      _
    $region3: #{dsso_forward.1} parent=1 // pred_check_branch
      %11 = sbr.rel (0) target = $region5
    $region4: #{dsso_forward.1} parent=1 // pred_region
      %s13 = ssub.s32 16, 16
      %14 = vsyncadd [#allocation4], %s13
      %s16 = sshll.u32 %s0, 4
      %s17 = int_to_ptr.vmem [resolvable:$true] %s16
      %19 = dma.vmem_to_smem %s17, 16, [#allocation2], [#allocation4]
    $region5: #{dsso_forward.1} parent=1 // pred_fallthru
      _
    // Predicated region
    $region6: #{dsso_forward.1} parent=1 // pred_check
      _
    $region7: #{dsso_forward.1} parent=1 // pred_check_branch
      %21 = sbr.rel (0) target = $region9
    $region8: #{dsso_forward.1} parent=1 // pred_region
      _
    $region9: #{dsso_forward.1} parent=1 // pred_fallthru
      _
    // Predicated region
    $region10: #{dsso_forward.1} parent=1 // pred_check
      _
    $region11: #{dsso_forward.1} parent=1 // pred_check_branch
      %23 = sbr.rel (0) target = $region13
    $region12: #{dsso_forward.1} parent=1 // pred_region
      _
    $region13: #{dsso_forward.1} parent=1 // pred_fallthru
      _
    // Predicated region
    $region14: #{dsso_forward.1} parent=1 // pred_check
      _
    $region15: #{dsso_forward.1} parent=1 // pred_check_branch
      %25 = sbr.rel (0) target = $region17
    $region16: #{dsso_forward.1} parent=1 // pred_region
      %26 = dma.done [#allocation4], 16
    $region17: #{dsso_forward.1} parent=1 // pred_fallthru
      _
    %27 = sfence
    %s28 = sld [smem:[#allocation2]]
    %s29 = sld [smem:[#allocation2 + $0x1]]
    %s30 = sld [smem:[#allocation2 + $0x2]]
    %s31 = sld [smem:[#allocation2 + $0x3]]
    %s32 = sld [smem:[#allocation2 + $0x4]]
    %s33 = sld [smem:[#allocation2 + $0x5]]
    %s34 = sld [smem:[#allocation2 + $0x6]]
    %s35 = sld [smem:[#allocation2 + $0x7]]
    %s36 = sld [smem:[#allocation2 + $0x8]]
    %s37 = sld [smem:[#allocation2 + $0x9]]
    %s38 = sld [smem:[#allocation2 + $0xa]]
    %s39 = sld [smem:[#allocation2 + $0xb]]
    %s40 = sld [smem:[#allocation2 + $0xc]]
    %s41 = sld [smem:[#allocation2 + $0xd]]
    %s42 = sld [smem:[#allocation2 + $0xe]]
    %s43 = sld [smem:[#allocation2 + $0xf]]
    %s44 = sld [smem:[#allocation2 + $0x10]]
    %s45 = sld [smem:[#allocation2 + $0x11]]
    %s46 = sld [smem:[#allocation2 + $0x12]]
    %s47 = sld [smem:[#allocation2 + $0x13]]
    %s48 = sld [smem:[#allocation2 + $0x14]]
    %s49 = sld [smem:[#allocation2 + $0x15]]
    %s50 = sld [smem:[#allocation2 + $0x16]]
    %s51 = sld [smem:[#allocation2 + $0x17]]
    %s52 = sld [smem:[#allocation2 + $0x18]]
    %s53 = sld [smem:[#allocation2 + $0x19]]
    %s54 = sld [smem:[#allocation2 + $0x1a]]
    %s55 = sld [smem:[#allocation2 + $0x1b]]
    %s56 = sld [smem:[#allocation2 + $0x1c]]
    %s57 = sld [smem:[#allocation2 + $0x1d]]
    %s58 = sld [smem:[#allocation2 + $0x1e]]
    %s59 = sld [smem:[#allocation2 + $0x1f]]
    %s60 = sld [smem:[#allocation2 + $0x20]]
    %s61 = sld [smem:[#allocation2 + $0x21]]
    %s62 = sld [smem:[#allocation2 + $0x22]]
    %s63 = sld [smem:[#allocation2 + $0x23]]
    %s64 = sld [smem:[#allocation2 + $0x24]]
    %s65 = sld [smem:[#allocation2 + $0x25]]
    %s66 = sld [smem:[#allocation2 + $0x26]]
    %s67 = sld [smem:[#allocation2 + $0x27]]
    %s68 = sld [smem:[#allocation2 + $0x28]]
    %v69 = vld [vmem:[%s1] sm:$0x3]
    %v70 = vld [vmem:[%s2] sm:$0x3]
    %v71 = vstv %s68
    %v72 = vmul.f32 %v71, %v69
    %v73 = vstv %s63
    %v74 = vmul.f32 %v73, 0.0
    %v75 = vadd.f32 %v72, %v74
    %v76 = vstv %s64
    %v77 = vmul.f32 %v76, 0.0
    %v78 = vadd.f32 %v75, %v77
    %v79 = vstv %s65
    %v80 = vmul.f32 %v79, 0.0
    %v81 = vadd.f32 %v78, %v80
    %v82 = vstv %s66
    %v83 = vmul.f32 %v82, 0.0
    %v84 = vadd.f32 %v81, %v83
    %v85 = vstv %s67
    %v86 = vmul.f32 %v85, 0.0
    %v87 = vadd.f32 %v84, %v86
    %v88 = vstv %s53
    %v89 = vmul.f32 %v88, %v69
    %v90 = vstv %s54
    %v91 = vmul.f32 %v90, %v70
    %v92 = vadd.f32 %v89, %v91
    %v93 = vstv %s28
    %v94 = vmul.f32 %v93, 0.0
    %v95 = vadd.f32 %v92, %v94
    %v96 = vstv %s29
    %v97 = vmul.f32 %v96, 0.0
    %v98 = vadd.f32 %v95, %v97
    %v99 = vstv %s30
    %v100 = vmul.f32 %v99, 0.0
    %v101 = vadd.f32 %v98, %v100
    %v102 = vstv %s31
    %v103 = vmul.f32 %v102, 0.0
    %v104 = vadd.f32 %v101, %v103
    %v105 = vstv %s32
    %v106 = vmul.f32 %v105, 0.0
    %v107 = vadd.f32 %v104, %v106
    %v108 = vstv %s55
    %v109 = vmul.f32 %v108, %v69
    %v110 = vstv %s56
    %v111 = vmul.f32 %v110, %v70
    %v112 = vadd.f32 %v109, %v111
    %v113 = vstv %s33
    %v114 = vmul.f32 %v113, 0.0
    %v115 = vadd.f32 %v112, %v114
    %v116 = vstv %s34
    %v117 = vmul.f32 %v116, 0.0
    %v118 = vadd.f32 %v115, %v117
    %v119 = vstv %s35
    %v120 = vmul.f32 %v119, 0.0
    %v121 = vadd.f32 %v118, %v120
    %v122 = vstv %s36
    %v123 = vmul.f32 %v122, 0.0
    %v124 = vadd.f32 %v121, %v123
    %v125 = vstv %s37
    %v126 = vmul.f32 %v125, 0.0
    %v127 = vadd.f32 %v124, %v126
    %v128 = vstv %s57
    %v129 = vmul.f32 %v128, %v69
    %v130 = vstv %s58
    %v131 = vmul.f32 %v130, %v70
    %v132 = vadd.f32 %v129, %v131
    %v133 = vstv %s38
    %v134 = vmul.f32 %v133, 0.0
    %v135 = vadd.f32 %v132, %v134
    %v136 = vstv %s39
    %v137 = vmul.f32 %v136, 0.0
    %v138 = vadd.f32 %v135, %v137
    %v139 = vstv %s40
    %v140 = vmul.f32 %v139, 0.0
    %v141 = vadd.f32 %v138, %v140
    %v142 = vstv %s41
    %v143 = vmul.f32 %v142, 0.0
    %v144 = vadd.f32 %v141, %v143
    %v145 = vstv %s42
    %v146 = vmul.f32 %v145, 0.0
    %v147 = vadd.f32 %v144, %v146
    %v148 = vstv %s59
    %v149 = vmul.f32 %v148, %v69
    %v150 = vstv %s60
    %v151 = vmul.f32 %v150, %v70
    %v152 = vadd.f32 %v149, %v151
    %v153 = vstv %s43
    %v154 = vmul.f32 %v153, 0.0
    %v155 = vadd.f32 %v152, %v154
    %v156 = vstv %s44
    %v157 = vmul.f32 %v156, 0.0
    %v158 = vadd.f32 %v155, %v157
    %v159 = vstv %s45
    %v160 = vmul.f32 %v159, 0.0
    %v161 = vadd.f32 %v158, %v160
    %v162 = vstv %s46
    %v163 = vmul.f32 %v162, 0.0
    %v164 = vadd.f32 %v161, %v163
    %v165 = vstv %s47
    %v166 = vmul.f32 %v165, 0.0
    %v167 = vadd.f32 %v164, %v166
    %v168 = vstv %s61
    %v169 = vmul.f32 %v168, %v69
    %v170 = vstv %s62
    %v171 = vmul.f32 %v170, %v70
    %v172 = vadd.f32 %v169, %v171
    %v173 = vstv %s48
    %v174 = vmul.f32 %v173, 0.0
    %v175 = vadd.f32 %v172, %v174
    %v176 = vstv %s49
    %v177 = vmul.f32 %v176, 0.0
    %v178 = vadd.f32 %v175, %v177
    %v179 = vstv %s50
    %v180 = vmul.f32 %v179, 0.0
    %v181 = vadd.f32 %v178, %v180
    %v182 = vstv %s51
    %v183 = vmul.f32 %v182, 0.0
    %v184 = vadd.f32 %v181, %v183
    %v185 = vstv %s52
    %v186 = vmul.f32 %v185, 0.0
    %v187 = vadd.f32 %v184, %v186
    %v188 = vmul.f32 %v73, %v107
    %190 = vrot.lane.b32.xlu0 %v188, 1
    %v191 = vpop.permute.xlu0 %190
    %v193 = vadd.f32 %v72, %v191
    %v194 = vmul.f32 %v76, %v127
    %196 = vrot.lane.b32.xlu0 %v194, 1
    %v197 = vpop.permute.xlu0 %196
    %v199 = vadd.f32 %v193, %v197
    %v200 = vmul.f32 %v79, %v147
    %202 = vrot.lane.b32.xlu0 %v200, 1
    %v203 = vpop.permute.xlu0 %202
    %v205 = vadd.f32 %v199, %v203
    %v206 = vmul.f32 %v82, %v167
    %208 = vrot.lane.b32.xlu0 %v206, 1
    %v209 = vpop.permute.xlu0 %208
    %v211 = vadd.f32 %v205, %v209
    %v212 = vmul.f32 %v85, %v187
    %214 = vrot.lane.b32.xlu0 %v212, 1
    %v215 = vpop.permute.xlu0 %214
    %v217 = vadd.f32 %v211, %v215
    %v218 = vmul.f32 %v93, %v107
    %220 = vrot.lane.b32.xlu0 %v218, 1
    %v221 = vpop.permute.xlu0 %220
    %v223 = vadd.f32 %v92, %v221
    %v224 = vmul.f32 %v96, %v127
    %226 = vrot.lane.b32.xlu0 %v224, 1
    %v227 = vpop.permute.xlu0 %226
    %v229 = vadd.f32 %v223, %v227
    %v230 = vmul.f32 %v99, %v147
    %232 = vrot.lane.b32.xlu0 %v230, 1
    %v233 = vpop.permute.xlu0 %232
    %v235 = vadd.f32 %v229, %v233
    %v236 = vmul.f32 %v102, %v167
    %238 = vrot.lane.b32.xlu0 %v236, 1
    %v239 = vpop.permute.xlu0 %238
    %v241 = vadd.f32 %v235, %v239
    %v242 = vmul.f32 %v105, %v187
    %244 = vrot.lane.b32.xlu0 %v242, 1
    %v245 = vpop.permute.xlu0 %244
    %v247 = vadd.f32 %v241, %v245
    %v248 = vmul.f32 %v113, %v107
    %250 = vrot.lane.b32.xlu0 %v248, 1
    %v251 = vpop.permute.xlu0 %250
    %v253 = vadd.f32 %v112, %v251
    %v254 = vmul.f32 %v116, %v127
    %256 = vrot.lane.b32.xlu0 %v254, 1
    %v257 = vpop.permute.xlu0 %256
    %v259 = vadd.f32 %v253, %v257
    %v260 = vmul.f32 %v119, %v147
    %262 = vrot.lane.b32.xlu0 %v260, 1
    %v263 = vpop.permute.xlu0 %262
    %v265 = vadd.f32 %v259, %v263
    %v266 = vmul.f32 %v122, %v167
    %268 = vrot.lane.b32.xlu0 %v266, 1
    %v269 = vpop.permute.xlu0 %268
    %v271 = vadd.f32 %v265, %v269
    %v272 = vmul.f32 %v125, %v187
    %274 = vrot.lane.b32.xlu0 %v272, 1
    %v275 = vpop.permute.xlu0 %274
    %v277 = vadd.f32 %v271, %v275
    %v278 = vmul.f32 %v133, %v107
    %280 = vrot.lane.b32.xlu0 %v278, 1
    %v281 = vpop.permute.xlu0 %280
    %v283 = vadd.f32 %v132, %v281
    %v284 = vmul.f32 %v136, %v127
    %286 = vrot.lane.b32.xlu0 %v284, 1
    %v287 = vpop.permute.xlu0 %286
    %v289 = vadd.f32 %v283, %v287
    %v290 = vmul.f32 %v139, %v147
    %292 = vrot.lane.b32.xlu0 %v290, 1
    %v293 = vpop.permute.xlu0 %292
    %v295 = vadd.f32 %v289, %v293
    %v296 = vmul.f32 %v142, %v167
    %298 = vrot.lane.b32.xlu0 %v296, 1
    %v299 = vpop.permute.xlu0 %298
    %v301 = vadd.f32 %v295, %v299
    %v302 = vmul.f32 %v145, %v187
    %304 = vrot.lane.b32.xlu0 %v302, 1
    %v305 = vpop.permute.xlu0 %304
    %v307 = vadd.f32 %v301, %v305
    %v308 = vmul.f32 %v153, %v107
    %310 = vrot.lane.b32.xlu0 %v308, 1
    %v311 = vpop.permute.xlu0 %310
    %v313 = vadd.f32 %v152, %v311
    %v314 = vmul.f32 %v156, %v127
    %316 = vrot.lane.b32.xlu0 %v314, 1
    %v317 = vpop.permute.xlu0 %316
    %v319 = vadd.f32 %v313, %v317
    %v320 = vmul.f32 %v159, %v147
    %322 = vrot.lane.b32.xlu0 %v320, 1
    %v323 = vpop.permute.xlu0 %322
    %v325 = vadd.f32 %v319, %v323
    %v326 = vmul.f32 %v162, %v167
    %328 = vrot.lane.b32.xlu0 %v326, 1
    %v329 = vpop.permute.xlu0 %328
    %v331 = vadd.f32 %v325, %v329
    %v332 = vmul.f32 %v165, %v187
    %334 = vrot.lane.b32.xlu0 %v332, 1
    %v335 = vpop.permute.xlu0 %334
    %v337 = vadd.f32 %v331, %v335
    %v338 = vmul.f32 %v173, %v107
    %340 = vrot.lane.b32.xlu0 %v338, 1
    %v341 = vpop.permute.xlu0 %340
    %v343 = vadd.f32 %v172, %v341
    %v344 = vmul.f32 %v176, %v127
    %346 = vrot.lane.b32.xlu0 %v344, 1
    %v347 = vpop.permute.xlu0 %346
    %v349 = vadd.f32 %v343, %v347
    %v350 = vmul.f32 %v179, %v147
    %352 = vrot.lane.b32.xlu0 %v350, 1
    %v353 = vpop.permute.xlu0 %352
    %v355 = vadd.f32 %v349, %v353
    %v356 = vmul.f32 %v182, %v167
    %358 = vrot.lane.b32.xlu0 %v356, 1
    %v359 = vpop.permute.xlu0 %358
    %v361 = vadd.f32 %v355, %v359
    %v362 = vmul.f32 %v185, %v187
    %364 = vrot.lane.b32.xlu0 %v362, 1
    %v365 = vpop.permute.xlu0 %364
    %v367 = vadd.f32 %v361, %v365
    %v368 = vmul.f32 %v73, %v247
    %370 = vrot.lane.b32.xlu0 %v368, 1
    %v371 = vpop.permute.xlu0 %370
    %v373 = vadd.f32 %v72, %v371
    %v374 = vmul.f32 %v76, %v277
    %376 = vrot.lane.b32.xlu0 %v374, 1
    %v377 = vpop.permute.xlu0 %376
    %v379 = vadd.f32 %v373, %v377
    %v380 = vmul.f32 %v79, %v307
    %382 = vrot.lane.b32.xlu0 %v380, 1
    %v383 = vpop.permute.xlu0 %382
    %v385 = vadd.f32 %v379, %v383
    %v386 = vmul.f32 %v82, %v337
    %388 = vrot.lane.b32.xlu0 %v386, 1
    %v389 = vpop.permute.xlu0 %388
    %v391 = vadd.f32 %v385, %v389
    %v392 = vmul.f32 %v85, %v367
    %394 = vrot.lane.b32.xlu0 %v392, 1
    %v395 = vpop.permute.xlu0 %394
    %v397 = vadd.f32 %v391, %v395
    %v398 = vmul.f32 %v93, %v247
    %400 = vrot.lane.b32.xlu0 %v398, 1
    %v401 = vpop.permute.xlu0 %400
    %v403 = vadd.f32 %v92, %v401
    %v404 = vmul.f32 %v96, %v277
    %406 = vrot.lane.b32.xlu0 %v404, 1
    %v407 = vpop.permute.xlu0 %406
    %v409 = vadd.f32 %v403, %v407
    %v410 = vmul.f32 %v99, %v307
    %412 = vrot.lane.b32.xlu0 %v410, 1
    %v413 = vpop.permute.xlu0 %412
    %v415 = vadd.f32 %v409, %v413
    %v416 = vmul.f32 %v102, %v337
    %418 = vrot.lane.b32.xlu0 %v416, 1
    %v419 = vpop.permute.xlu0 %418
    %v421 = vadd.f32 %v415, %v419
    %v422 = vmul.f32 %v105, %v367
    %424 = vrot.lane.b32.xlu0 %v422, 1
    %v425 = vpop.permute.xlu0 %424
    %v427 = vadd.f32 %v421, %v425
    %v428 = vmul.f32 %v113, %v247
    %430 = vrot.lane.b32.xlu0 %v428, 1
    %v431 = vpop.permute.xlu0 %430
    %v433 = vadd.f32 %v112, %v431
    %v434 = vmul.f32 %v116, %v277
    %436 = vrot.lane.b32.xlu0 %v434, 1
    %v437 = vpop.permute.xlu0 %436
    %v439 = vadd.f32 %v433, %v437
    %v440 = vmul.f32 %v119, %v307
    %442 = vrot.lane.b32.xlu0 %v440, 1
    %v443 = vpop.permute.xlu0 %442
    %v445 = vadd.f32 %v439, %v443
    %v446 = vmul.f32 %v122, %v337
    %448 = vrot.lane.b32.xlu0 %v446, 1
    %v449 = vpop.permute.xlu0 %448
    %v451 = vadd.f32 %v445, %v449
    %v452 = vmul.f32 %v125, %v367
    %454 = vrot.lane.b32.xlu0 %v452, 1
    %v455 = vpop.permute.xlu0 %454
    %v457 = vadd.f32 %v451, %v455
    %v458 = vmul.f32 %v133, %v247
    %460 = vrot.lane.b32.xlu0 %v458, 1
    %v461 = vpop.permute.xlu0 %460
    %v463 = vadd.f32 %v132, %v461
    %v464 = vmul.f32 %v136, %v277
    %466 = vrot.lane.b32.xlu0 %v464, 1
    %v467 = vpop.permute.xlu0 %466
    %v469 = vadd.f32 %v463, %v467
    %v470 = vmul.f32 %v139, %v307
    %472 = vrot.lane.b32.xlu0 %v470, 1
    %v473 = vpop.permute.xlu0 %472
    %v475 = vadd.f32 %v469, %v473
    %v476 = vmul.f32 %v142, %v337
    %478 = vrot.lane.b32.xlu0 %v476, 1
    %v479 = vpop.permute.xlu0 %478
    %v481 = vadd.f32 %v475, %v479
    %v482 = vmul.f32 %v145, %v367
    %484 = vrot.lane.b32.xlu0 %v482, 1
    %v485 = vpop.permute.xlu0 %484
    %v487 = vadd.f32 %v481, %v485
    %v488 = vmul.f32 %v153, %v247
    %490 = vrot.lane.b32.xlu0 %v488, 1
    %v491 = vpop.permute.xlu0 %490
    %v493 = vadd.f32 %v152, %v491
    %v494 = vmul.f32 %v156, %v277
    %496 = vrot.lane.b32.xlu0 %v494, 1
    %v497 = vpop.permute.xlu0 %496
    %v499 = vadd.f32 %v493, %v497
    %v500 = vmul.f32 %v159, %v307
    %502 = vrot.lane.b32.xlu0 %v500, 1
    %v503 = vpop.permute.xlu0 %502
    %v505 = vadd.f32 %v499, %v503
    %v506 = vmul.f32 %v162, %v337
    %508 = vrot.lane.b32.xlu0 %v506, 1
    %v509 = vpop.permute.xlu0 %508
    %v511 = vadd.f32 %v505, %v509
    %v512 = vmul.f32 %v165, %v367
    %514 = vrot.lane.b32.xlu0 %v512, 1
    %v515 = vpop.permute.xlu0 %514
    %v517 = vadd.f32 %v511, %v515
    %v518 = vmul.f32 %v173, %v247
    %520 = vrot.lane.b32.xlu0 %v518, 1
    %v521 = vpop.permute.xlu0 %520
    %v523 = vadd.f32 %v172, %v521
    %v524 = vmul.f32 %v176, %v277
    %526 = vrot.lane.b32.xlu0 %v524, 1
    %v527 = vpop.permute.xlu0 %526
    %v529 = vadd.f32 %v523, %v527
    %v530 = vmul.f32 %v179, %v307
    %532 = vrot.lane.b32.xlu0 %v530, 1
    %v533 = vpop.permute.xlu0 %532
    %v535 = vadd.f32 %v529, %v533
    %v536 = vmul.f32 %v182, %v337
    %538 = vrot.lane.b32.xlu0 %v536, 1
    %v539 = vpop.permute.xlu0 %538
    %v541 = vadd.f32 %v535, %v539
    %v542 = vmul.f32 %v185, %v367
    %544 = vrot.lane.b32.xlu0 %v542, 1
    %v545 = vpop.permute.xlu0 %544
    %v547 = vadd.f32 %v541, %v545
    %v548 = vmul.f32 %v73, %v427
    %550 = vrot.lane.b32.xlu0 %v548, 1
    %v551 = vpop.permute.xlu0 %550
    %v553 = vadd.f32 %v72, %v551
    %v554 = vmul.f32 %v76, %v457
    %556 = vrot.lane.b32.xlu0 %v554, 1
    %v557 = vpop.permute.xlu0 %556
    %v559 = vadd.f32 %v553, %v557
    %v560 = vmul.f32 %v79, %v487
    %562 = vrot.lane.b32.xlu0 %v560, 1
    %v563 = vpop.permute.xlu0 %562
    %v565 = vadd.f32 %v559, %v563
    %v566 = vmul.f32 %v82, %v517
    %568 = vrot.lane.b32.xlu0 %v566, 1
    %v569 = vpop.permute.xlu0 %568
    %v571 = vadd.f32 %v565, %v569
    %v572 = vmul.f32 %v85, %v547
    %574 = vrot.lane.b32.xlu0 %v572, 1
    %v575 = vpop.permute.xlu0 %574
    %v577 = vadd.f32 %v571, %v575
    %v578 = vmul.f32 %v93, %v427
    %580 = vrot.lane.b32.xlu0 %v578, 1
    %v581 = vpop.permute.xlu0 %580
    %v583 = vadd.f32 %v92, %v581
    %v584 = vmul.f32 %v96, %v457
    %586 = vrot.lane.b32.xlu0 %v584, 1
    %v587 = vpop.permute.xlu0 %586
    %v589 = vadd.f32 %v583, %v587
    %v590 = vmul.f32 %v99, %v487
    %592 = vrot.lane.b32.xlu0 %v590, 1
    %v593 = vpop.permute.xlu0 %592
    %v595 = vadd.f32 %v589, %v593
    %v596 = vmul.f32 %v102, %v517
    %598 = vrot.lane.b32.xlu0 %v596, 1
    %v599 = vpop.permute.xlu0 %598
    %v601 = vadd.f32 %v595, %v599
    %v602 = vmul.f32 %v105, %v547
    %604 = vrot.lane.b32.xlu0 %v602, 1
    %v605 = vpop.permute.xlu0 %604
    %v607 = vadd.f32 %v601, %v605
    %v608 = vmul.f32 %v113, %v427
    %610 = vrot.lane.b32.xlu0 %v608, 1
    %v611 = vpop.permute.xlu0 %610
    %v613 = vadd.f32 %v112, %v611
    %v614 = vmul.f32 %v116, %v457
    %616 = vrot.lane.b32.xlu0 %v614, 1
    %v617 = vpop.permute.xlu0 %616
    %v619 = vadd.f32 %v613, %v617
    %v620 = vmul.f32 %v119, %v487
    %622 = vrot.lane.b32.xlu0 %v620, 1
    %v623 = vpop.permute.xlu0 %622
    %v625 = vadd.f32 %v619, %v623
    %v626 = vmul.f32 %v122, %v517
    %628 = vrot.lane.b32.xlu0 %v626, 1
    %v629 = vpop.permute.xlu0 %628
    %v631 = vadd.f32 %v625, %v629
    %v632 = vmul.f32 %v125, %v547
    %634 = vrot.lane.b32.xlu0 %v632, 1
    %v635 = vpop.permute.xlu0 %634
    %v637 = vadd.f32 %v631, %v635
    %v638 = vmul.f32 %v133, %v427
    %640 = vrot.lane.b32.xlu0 %v638, 1
    %v641 = vpop.permute.xlu0 %640
    %v643 = vadd.f32 %v132, %v641
    %v644 = vmul.f32 %v136, %v457
    %646 = vrot.lane.b32.xlu0 %v644, 1
    %v647 = vpop.permute.xlu0 %646
    %v649 = vadd.f32 %v643, %v647
    %v650 = vmul.f32 %v139, %v487
    %652 = vrot.lane.b32.xlu0 %v650, 1
    %v653 = vpop.permute.xlu0 %652
    %v655 = vadd.f32 %v649, %v653
    %v656 = vmul.f32 %v142, %v517
    %658 = vrot.lane.b32.xlu0 %v656, 1
    %v659 = vpop.permute.xlu0 %658
    %v661 = vadd.f32 %v655, %v659
    %v662 = vmul.f32 %v145, %v547
    %664 = vrot.lane.b32.xlu0 %v662, 1
    %v665 = vpop.permute.xlu0 %664
    %v667 = vadd.f32 %v661, %v665
    %v668 = vmul.f32 %v153, %v427
    %670 = vrot.lane.b32.xlu0 %v668, 1
    %v671 = vpop.permute.xlu0 %670
    %v673 = vadd.f32 %v152, %v671
    %v674 = vmul.f32 %v156, %v457
    %676 = vrot.lane.b32.xlu0 %v674, 1
    %v677 = vpop.permute.xlu0 %676
    %v679 = vadd.f32 %v673, %v677
    %v680 = vmul.f32 %v159, %v487
    %682 = vrot.lane.b32.xlu0 %v680, 1
    %v683 = vpop.permute.xlu0 %682
    %v685 = vadd.f32 %v679, %v683
    %v686 = vmul.f32 %v162, %v517
    %688 = vrot.lane.b32.xlu0 %v686, 1
    %v689 = vpop.permute.xlu0 %688
    %v691 = vadd.f32 %v685, %v689
    %v692 = vmul.f32 %v165, %v547
    %694 = vrot.lane.b32.xlu0 %v692, 1
    %v695 = vpop.permute.xlu0 %694
    %v697 = vadd.f32 %v691, %v695
    %v698 = vmul.f32 %v173, %v427
    %700 = vrot.lane.b32.xlu0 %v698, 1
    %v701 = vpop.permute.xlu0 %700
    %v703 = vadd.f32 %v172, %v701
    %v704 = vmul.f32 %v176, %v457
    %706 = vrot.lane.b32.xlu0 %v704, 1
    %v707 = vpop.permute.xlu0 %706
    %v709 = vadd.f32 %v703, %v707
    %v710 = vmul.f32 %v179, %v487
    %712 = vrot.lane.b32.xlu0 %v710, 1
    %v713 = vpop.permute.xlu0 %712
    %v715 = vadd.f32 %v709, %v713
    %v716 = vmul.f32 %v182, %v517
    %718 = vrot.lane.b32.xlu0 %v716, 1
    %v719 = vpop.permute.xlu0 %718
    %v721 = vadd.f32 %v715, %v719
    %v722 = vmul.f32 %v185, %v547
    %724 = vrot.lane.b32.xlu0 %v722, 1
    %v725 = vpop.permute.xlu0 %724
    %v727 = vadd.f32 %v721, %v725
    %v728 = vmul.f32 %v73, %v607
    %730 = vrot.lane.b32.xlu0 %v728, 1
    %v731 = vpop.permute.xlu0 %730
    %v733 = vadd.f32 %v72, %v731
    %v734 = vmul.f32 %v76, %v637
    %736 = vrot.lane.b32.xlu0 %v734, 1
    %v737 = vpop.permute.xlu0 %736
    %v739 = vadd.f32 %v733, %v737
    %v740 = vmul.f32 %v79, %v667
    %742 = vrot.lane.b32.xlu0 %v740, 1
    %v743 = vpop.permute.xlu0 %742
    %v745 = vadd.f32 %v739, %v743
    %v746 = vmul.f32 %v82, %v697
    %748 = vrot.lane.b32.xlu0 %v746, 1
    %v749 = vpop.permute.xlu0 %748
    %v751 = vadd.f32 %v745, %v749
    %v752 = vmul.f32 %v85, %v727
    %754 = vrot.lane.b32.xlu0 %v752, 1
    %v755 = vpop.permute.xlu0 %754
    %v757 = vadd.f32 %v751, %v755
    %v758 = vmul.f32 %v93, %v607
    %760 = vrot.lane.b32.xlu0 %v758, 1
    %v761 = vpop.permute.xlu0 %760
    %v763 = vadd.f32 %v92, %v761
    %v764 = vmul.f32 %v96, %v637
    %766 = vrot.lane.b32.xlu0 %v764, 1
    %v767 = vpop.permute.xlu0 %766
    %v769 = vadd.f32 %v763, %v767
    %v770 = vmul.f32 %v99, %v667
    %772 = vrot.lane.b32.xlu0 %v770, 1
    %v773 = vpop.permute.xlu0 %772
    %v775 = vadd.f32 %v769, %v773
    %v776 = vmul.f32 %v102, %v697
    %778 = vrot.lane.b32.xlu0 %v776, 1
    %v779 = vpop.permute.xlu0 %778
    %v781 = vadd.f32 %v775, %v779
    %v782 = vmul.f32 %v105, %v727
    %784 = vrot.lane.b32.xlu0 %v782, 1
    %v785 = vpop.permute.xlu0 %784
    %v787 = vadd.f32 %v781, %v785
    %v788 = vmul.f32 %v113, %v607
    %790 = vrot.lane.b32.xlu0 %v788, 1
    %v791 = vpop.permute.xlu0 %790
    %v793 = vadd.f32 %v112, %v791
    %v794 = vmul.f32 %v116, %v637
    %796 = vrot.lane.b32.xlu0 %v794, 1
    %v797 = vpop.permute.xlu0 %796
    %v799 = vadd.f32 %v793, %v797
    %v800 = vmul.f32 %v119, %v667
    %802 = vrot.lane.b32.xlu0 %v800, 1
    %v803 = vpop.permute.xlu0 %802
    %v805 = vadd.f32 %v799, %v803
    %v806 = vmul.f32 %v122, %v697
    %808 = vrot.lane.b32.xlu0 %v806, 1
    %v809 = vpop.permute.xlu0 %808
    %v811 = vadd.f32 %v805, %v809
    %v812 = vmul.f32 %v125, %v727
    %814 = vrot.lane.b32.xlu0 %v812, 1
    %v815 = vpop.permute.xlu0 %814
    %v817 = vadd.f32 %v811, %v815
    %v818 = vmul.f32 %v133, %v607
    %820 = vrot.lane.b32.xlu0 %v818, 1
    %v821 = vpop.permute.xlu0 %820
    %v823 = vadd.f32 %v132, %v821
    %v824 = vmul.f32 %v136, %v637
    %826 = vrot.lane.b32.xlu0 %v824, 1
    %v827 = vpop.permute.xlu0 %826
    %v829 = vadd.f32 %v823, %v827
    %v830 = vmul.f32 %v139, %v667
    %832 = vrot.lane.b32.xlu0 %v830, 1
    %v833 = vpop.permute.xlu0 %832
    %v835 = vadd.f32 %v829, %v833
    %v836 = vmul.f32 %v142, %v697
    %838 = vrot.lane.b32.xlu0 %v836, 1
    %v839 = vpop.permute.xlu0 %838
    %v841 = vadd.f32 %v835, %v839
    %v842 = vmul.f32 %v145, %v727
    %844 = vrot.lane.b32.xlu0 %v842, 1
    %v845 = vpop.permute.xlu0 %844
    %v847 = vadd.f32 %v841, %v845
    %v848 = vmul.f32 %v153, %v607
    %850 = vrot.lane.b32.xlu0 %v848, 1
    %v851 = vpop.permute.xlu0 %850
    %v853 = vadd.f32 %v152, %v851
    %v854 = vmul.f32 %v156, %v637
    %856 = vrot.lane.b32.xlu0 %v854, 1
    %v857 = vpop.permute.xlu0 %856
    %v859 = vadd.f32 %v853, %v857
    %v860 = vmul.f32 %v159, %v667
    %862 = vrot.lane.b32.xlu0 %v860, 1
    %v863 = vpop.permute.xlu0 %862
    %v865 = vadd.f32 %v859, %v863
    %v866 = vmul.f32 %v162, %v697
    %868 = vrot.lane.b32.xlu0 %v866, 1
    %v869 = vpop.permute.xlu0 %868
    %v871 = vadd.f32 %v865, %v869
    %v872 = vmul.f32 %v165, %v727
    %874 = vrot.lane.b32.xlu0 %v872, 1
    %v875 = vpop.permute.xlu0 %874
    %v877 = vadd.f32 %v871, %v875
    %v878 = vmul.f32 %v173, %v607
    %880 = vrot.lane.b32.xlu0 %v878, 1
    %v881 = vpop.permute.xlu0 %880
    %v883 = vadd.f32 %v172, %v881
    %v884 = vmul.f32 %v176, %v637
    %886 = vrot.lane.b32.xlu0 %v884, 1
    %v887 = vpop.permute.xlu0 %886
    %v889 = vadd.f32 %v883, %v887
    %v890 = vmul.f32 %v179, %v667
    %892 = vrot.lane.b32.xlu0 %v890, 1
    %v893 = vpop.permute.xlu0 %892
    %v895 = vadd.f32 %v889, %v893
    %v896 = vmul.f32 %v182, %v697
    %898 = vrot.lane.b32.xlu0 %v896, 1
    %v899 = vpop.permute.xlu0 %898
    %v901 = vadd.f32 %v895, %v899
    %v902 = vmul.f32 %v185, %v727
    %904 = vrot.lane.b32.xlu0 %v902, 1
    %v905 = vpop.permute.xlu0 %904
    %v907 = vadd.f32 %v901, %v905
    %v908 = vmul.f32 %v73, %v787
    %910 = vrot.lane.b32.xlu0 %v908, 1
    %v911 = vpop.permute.xlu0 %910
    %v913 = vadd.f32 %v72, %v911
    %v914 = vmul.f32 %v76, %v817
    %916 = vrot.lane.b32.xlu0 %v914, 1
    %v917 = vpop.permute.xlu0 %916
    %v919 = vadd.f32 %v913, %v917
    %v920 = vmul.f32 %v79, %v847
    %922 = vrot.lane.b32.xlu0 %v920, 1
    %v923 = vpop.permute.xlu0 %922
    %v925 = vadd.f32 %v919, %v923
    %v926 = vmul.f32 %v82, %v877
    %928 = vrot.lane.b32.xlu0 %v926, 1
    %v929 = vpop.permute.xlu0 %928
    %v931 = vadd.f32 %v925, %v929
    %v932 = vmul.f32 %v85, %v907
    %934 = vrot.lane.b32.xlu0 %v932, 1
    %v935 = vpop.permute.xlu0 %934
    %v937 = vadd.f32 %v931, %v935
    %v938 = vmul.f32 %v93, %v787
    %940 = vrot.lane.b32.xlu0 %v938, 1
    %v941 = vpop.permute.xlu0 %940
    %v943 = vadd.f32 %v92, %v941
    %v944 = vmul.f32 %v96, %v817
    %946 = vrot.lane.b32.xlu0 %v944, 1
    %v947 = vpop.permute.xlu0 %946
    %v949 = vadd.f32 %v943, %v947
    %v950 = vmul.f32 %v99, %v847
    %952 = vrot.lane.b32.xlu0 %v950, 1
    %v953 = vpop.permute.xlu0 %952
    %v955 = vadd.f32 %v949, %v953
    %v956 = vmul.f32 %v102, %v877
    %958 = vrot.lane.b32.xlu0 %v956, 1
    %v959 = vpop.permute.xlu0 %958
    %v961 = vadd.f32 %v955, %v959
    %v962 = vmul.f32 %v105, %v907
    %964 = vrot.lane.b32.xlu0 %v962, 1
    %v965 = vpop.permute.xlu0 %964
    %v967 = vadd.f32 %v961, %v965
    %v968 = vmul.f32 %v113, %v787
    %970 = vrot.lane.b32.xlu0 %v968, 1
    %v971 = vpop.permute.xlu0 %970
    %v973 = vadd.f32 %v112, %v971
    %v974 = vmul.f32 %v116, %v817
    %976 = vrot.lane.b32.xlu0 %v974, 1
    %v977 = vpop.permute.xlu0 %976
    %v979 = vadd.f32 %v973, %v977
    %v980 = vmul.f32 %v119, %v847
    %982 = vrot.lane.b32.xlu0 %v980, 1
    %v983 = vpop.permute.xlu0 %982
    %v985 = vadd.f32 %v979, %v983
    %v986 = vmul.f32 %v122, %v877
    %988 = vrot.lane.b32.xlu0 %v986, 1
    %v989 = vpop.permute.xlu0 %988
    %v991 = vadd.f32 %v985, %v989
    %v992 = vmul.f32 %v125, %v907
    %994 = vrot.lane.b32.xlu0 %v992, 1
    %v995 = vpop.permute.xlu0 %994
    %v997 = vadd.f32 %v991, %v995
    %v998 = vmul.f32 %v133, %v787
    %1000 = vrot.lane.b32.xlu0 %v998, 1
    %v1001 = vpop.permute.xlu0 %1000
    %v1003 = vadd.f32 %v132, %v1001
    %v1004 = vmul.f32 %v136, %v817
    %1006 = vrot.lane.b32.xlu0 %v1004, 1
    %v1007 = vpop.permute.xlu0 %1006
    %v1009 = vadd.f32 %v1003, %v1007
    %v1010 = vmul.f32 %v139, %v847
    %1012 = vrot.lane.b32.xlu0 %v1010, 1
    %v1013 = vpop.permute.xlu0 %1012
    %v1015 = vadd.f32 %v1009, %v1013
    %v1016 = vmul.f32 %v142, %v877
    %1018 = vrot.lane.b32.xlu0 %v1016, 1
    %v1019 = vpop.permute.xlu0 %1018
    %v1021 = vadd.f32 %v1015, %v1019
    %v1022 = vmul.f32 %v145, %v907
    %1024 = vrot.lane.b32.xlu0 %v1022, 1
    %v1025 = vpop.permute.xlu0 %1024
    %v1027 = vadd.f32 %v1021, %v1025
    %v1028 = vmul.f32 %v153, %v787
    %1030 = vrot.lane.b32.xlu0 %v1028, 1
    %v1031 = vpop.permute.xlu0 %1030
    %v1033 = vadd.f32 %v152, %v1031
    %v1034 = vmul.f32 %v156, %v817
    %1036 = vrot.lane.b32.xlu0 %v1034, 1
    %v1037 = vpop.permute.xlu0 %1036
    %v1039 = vadd.f32 %v1033, %v1037
    %v1040 = vmul.f32 %v159, %v847
    %1042 = vrot.lane.b32.xlu0 %v1040, 1
    %v1043 = vpop.permute.xlu0 %1042
    %v1045 = vadd.f32 %v1039, %v1043
    %v1046 = vmul.f32 %v162, %v877
    %1048 = vrot.lane.b32.xlu0 %v1046, 1
    %v1049 = vpop.permute.xlu0 %1048
    %v1051 = vadd.f32 %v1045, %v1049
    %v1052 = vmul.f32 %v165, %v907
    %1054 = vrot.lane.b32.xlu0 %v1052, 1
    %v1055 = vpop.permute.xlu0 %1054
    %v1057 = vadd.f32 %v1051, %v1055
    %v1058 = vmul.f32 %v173, %v787
    %1060 = vrot.lane.b32.xlu0 %v1058, 1
    %v1061 = vpop.permute.xlu0 %1060
    %v1063 = vadd.f32 %v172, %v1061
    %v1064 = vmul.f32 %v176, %v817
    %1066 = vrot.lane.b32.xlu0 %v1064, 1
    %v1067 = vpop.permute.xlu0 %1066
    %v1069 = vadd.f32 %v1063, %v1067
    %v1070 = vmul.f32 %v179, %v847
    %1072 = vrot.lane.b32.xlu0 %v1070, 1
    %v1073 = vpop.permute.xlu0 %1072
    %v1075 = vadd.f32 %v1069, %v1073
    %v1076 = vmul.f32 %v182, %v877
    %1078 = vrot.lane.b32.xlu0 %v1076, 1
    %v1079 = vpop.permute.xlu0 %1078
    %v1081 = vadd.f32 %v1075, %v1079
    %v1082 = vmul.f32 %v185, %v907
    %1084 = vrot.lane.b32.xlu0 %v1082, 1
    %v1085 = vpop.permute.xlu0 %1084
    %v1087 = vadd.f32 %v1081, %v1085
    %v1088 = vmul.f32 %v73, %v967
    %1090 = vrot.lane.b32.xlu0 %v1088, 1
    %v1091 = vpop.permute.xlu0 %1090
    %v1093 = vadd.f32 %v72, %v1091
    %v1094 = vmul.f32 %v76, %v997
    %1096 = vrot.lane.b32.xlu0 %v1094, 1
    %v1097 = vpop.permute.xlu0 %1096
    %v1099 = vadd.f32 %v1093, %v1097
    %v1100 = vmul.f32 %v79, %v1027
    %1102 = vrot.lane.b32.xlu0 %v1100, 1
    %v1103 = vpop.permute.xlu0 %1102
    %v1105 = vadd.f32 %v1099, %v1103
    %v1106 = vmul.f32 %v82, %v1057
    %1108 = vrot.lane.b32.xlu0 %v1106, 1
    %v1109 = vpop.permute.xlu0 %1108
    %v1111 = vadd.f32 %v1105, %v1109
    %v1112 = vmul.f32 %v85, %v1087
    %1114 = vrot.lane.b32.xlu0 %v1112, 1
    %v1115 = vpop.permute.xlu0 %1114
    %v1117 = vadd.f32 %v1111, %v1115
    %v1118 = vmul.f32 %v93, %v967
    %1120 = vrot.lane.b32.xlu0 %v1118, 1
    %v1121 = vpop.permute.xlu0 %1120
    %v1123 = vadd.f32 %v92, %v1121
    %v1124 = vmul.f32 %v96, %v997
    %1126 = vrot.lane.b32.xlu0 %v1124, 1
    %v1127 = vpop.permute.xlu0 %1126
    %v1129 = vadd.f32 %v1123, %v1127
    %v1130 = vmul.f32 %v99, %v1027
    %1132 = vrot.lane.b32.xlu0 %v1130, 1
    %v1133 = vpop.permute.xlu0 %1132
    %v1135 = vadd.f32 %v1129, %v1133
    %v1136 = vmul.f32 %v102, %v1057
    %1138 = vrot.lane.b32.xlu0 %v1136, 1
    %v1139 = vpop.permute.xlu0 %1138
    %v1141 = vadd.f32 %v1135, %v1139
    %v1142 = vmul.f32 %v105, %v1087
    %1144 = vrot.lane.b32.xlu0 %v1142, 1
    %v1145 = vpop.permute.xlu0 %1144
    %v1147 = vadd.f32 %v1141, %v1145
    %v1148 = vmul.f32 %v113, %v967
    %1150 = vrot.lane.b32.xlu0 %v1148, 1
    %v1151 = vpop.permute.xlu0 %1150
    %v1153 = vadd.f32 %v112, %v1151
    %v1154 = vmul.f32 %v116, %v997
    %1156 = vrot.lane.b32.xlu0 %v1154, 1
    %v1157 = vpop.permute.xlu0 %1156
    %v1159 = vadd.f32 %v1153, %v1157
    %v1160 = vmul.f32 %v119, %v1027
    %1162 = vrot.lane.b32.xlu0 %v1160, 1
    %v1163 = vpop.permute.xlu0 %1162
    %v1165 = vadd.f32 %v1159, %v1163
    %v1166 = vmul.f32 %v122, %v1057
    %1168 = vrot.lane.b32.xlu0 %v1166, 1
    %v1169 = vpop.permute.xlu0 %1168
    %v1171 = vadd.f32 %v1165, %v1169
    %v1172 = vmul.f32 %v125, %v1087
    %1174 = vrot.lane.b32.xlu0 %v1172, 1
    %v1175 = vpop.permute.xlu0 %1174
    %v1177 = vadd.f32 %v1171, %v1175
    %v1178 = vmul.f32 %v133, %v967
    %1180 = vrot.lane.b32.xlu0 %v1178, 1
    %v1181 = vpop.permute.xlu0 %1180
    %v1183 = vadd.f32 %v132, %v1181
    %v1184 = vmul.f32 %v136, %v997
    %1186 = vrot.lane.b32.xlu0 %v1184, 1
    %v1187 = vpop.permute.xlu0 %1186
    %v1189 = vadd.f32 %v1183, %v1187
    %v1190 = vmul.f32 %v139, %v1027
    %1192 = vrot.lane.b32.xlu0 %v1190, 1
    %v1193 = vpop.permute.xlu0 %1192
    %v1195 = vadd.f32 %v1189, %v1193
    %v1196 = vmul.f32 %v142, %v1057
    %1198 = vrot.lane.b32.xlu0 %v1196, 1
    %v1199 = vpop.permute.xlu0 %1198
    %v1201 = vadd.f32 %v1195, %v1199
    %v1202 = vmul.f32 %v145, %v1087
    %1204 = vrot.lane.b32.xlu0 %v1202, 1
    %v1205 = vpop.permute.xlu0 %1204
    %v1207 = vadd.f32 %v1201, %v1205
    %v1208 = vmul.f32 %v153, %v967
    %1210 = vrot.lane.b32.xlu0 %v1208, 1
    %v1211 = vpop.permute.xlu0 %1210
    %v1213 = vadd.f32 %v152, %v1211
    %v1214 = vmul.f32 %v156, %v997
    %1216 = vrot.lane.b32.xlu0 %v1214, 1
    %v1217 = vpop.permute.xlu0 %1216
    %v1219 = vadd.f32 %v1213, %v1217
    %v1220 = vmul.f32 %v159, %v1027
    %1222 = vrot.lane.b32.xlu0 %v1220, 1
    %v1223 = vpop.permute.xlu0 %1222
    %v1225 = vadd.f32 %v1219, %v1223
    %v1226 = vmul.f32 %v162, %v1057
    %1228 = vrot.lane.b32.xlu0 %v1226, 1
    %v1229 = vpop.permute.xlu0 %1228
    %v1231 = vadd.f32 %v1225, %v1229
    %v1232 = vmul.f32 %v165, %v1087
    %1234 = vrot.lane.b32.xlu0 %v1232, 1
    %v1235 = vpop.permute.xlu0 %1234
    %v1237 = vadd.f32 %v1231, %v1235
    %v1238 = vmul.f32 %v173, %v967
    %1240 = vrot.lane.b32.xlu0 %v1238, 1
    %v1241 = vpop.permute.xlu0 %1240
    %v1243 = vadd.f32 %v172, %v1241
    %v1244 = vmul.f32 %v176, %v997
    %1246 = vrot.lane.b32.xlu0 %v1244, 1
    %v1247 = vpop.permute.xlu0 %1246
    %v1249 = vadd.f32 %v1243, %v1247
    %v1250 = vmul.f32 %v179, %v1027
    %1252 = vrot.lane.b32.xlu0 %v1250, 1
    %v1253 = vpop.permute.xlu0 %1252
    %v1255 = vadd.f32 %v1249, %v1253
    %v1256 = vmul.f32 %v182, %v1057
    %1258 = vrot.lane.b32.xlu0 %v1256, 1
    %v1259 = vpop.permute.xlu0 %1258
    %v1261 = vadd.f32 %v1255, %v1259
    %v1262 = vmul.f32 %v185, %v1087
    %1264 = vrot.lane.b32.xlu0 %v1262, 1
    %v1265 = vpop.permute.xlu0 %1264
    %v1267 = vadd.f32 %v1261, %v1265
    %v1268 = vmul.f32 %v73, %v1147
    %1270 = vrot.lane.b32.xlu0 %v1268, 1
    %v1271 = vpop.permute.xlu0 %1270
    %v1273 = vadd.f32 %v72, %v1271
    %v1274 = vmul.f32 %v76, %v1177
    %1276 = vrot.lane.b32.xlu0 %v1274, 1
    %v1277 = vpop.permute.xlu0 %1276
    %v1279 = vadd.f32 %v1273, %v1277
    %v1280 = vmul.f32 %v79, %v1207
    %1282 = vrot.lane.b32.xlu0 %v1280, 1
    %v1283 = vpop.permute.xlu0 %1282
    %v1285 = vadd.f32 %v1279, %v1283
    %v1286 = vmul.f32 %v82, %v1237
    %1288 = vrot.lane.b32.xlu0 %v1286, 1
    %v1289 = vpop.permute.xlu0 %1288
    %v1291 = vadd.f32 %v1285, %v1289
    %v1292 = vmul.f32 %v85, %v1267
    %1294 = vrot.lane.b32.xlu0 %v1292, 1
    %v1295 = vpop.permute.xlu0 %1294
    %v1297 = vadd.f32 %v1291, %v1295
    %vm1298 = vcmask 7168
    %v1299 = vsel %vm1298, %v87, %v217
    %vm1300 = vcmask 15360
    %v1301 = vsel %vm1300, %v1299, %v397
    %vm1302 = vcmask 23552
    %v1303 = vsel %vm1302, %v1301, %v577
    %vm1304 = vcmask 31744
    %v1305 = vsel %vm1304, %v1303, %v757
    %vm1306 = vcmask 39936
    %v1307 = vsel %vm1306, %v1305, %v937
    %vm1308 = vcmask 48128
    %v1309 = vsel %vm1308, %v1307, %v1117
    %vm1310 = vcmask 56320
    %v1311 = vsel %vm1310, %v1309, %v1297
    %v1312 = vtanh.pop %v1311
    %vm1313 = vcmask 58368
    %1314 = vst.msk [vmem:[#allocation5] sm:$0x3] %vm1313, %v1312
    // Predicated region
    $region18: #{dsso_forward.1} parent=1 // pred_check
      _
    $region19: #{dsso_forward.1} parent=1 // pred_check_branch
      %1316 = sbr.rel (0) target = $region21
    $region20: #{dsso_forward.1} parent=1 // pred_region
      %s1318 = ssub.s32 32, 32
      %1319 = vsyncadd [#allocation3], %s1318
      %s1321 = sshll.u32 [#allocation5], 4
      %s1322 = int_to_ptr.vmem [resolvable:$true] %s1321
      %1324 = dma.vmem_to_hbm [thread:$0]  %s1322, 32, %s3, [#allocation3]
    $region21: #{dsso_forward.1} parent=1 // pred_fallthru
      _
    // Predicated region
    $region22: #{dsso_forward.1} parent=1 // pred_check
      _
    $region23: #{dsso_forward.1} parent=1 // pred_check_branch
      %1326 = sbr.rel (0) target = $region25
    $region24: #{dsso_forward.1} parent=1 // pred_region
      %1327 = dma.done [#allocation3], 32
    $region25: #{dsso_forward.1} parent=1 // pred_fallthru
      _
    %1328 = vsyncpa [#allocation3], 1
    %1329 = vsyncpa [#allocation4], 1

</llo_original>
